<compile_context>
chip_gen: v5e
topology: v5e:2x2
jax: 0.10.0
libtpu: 0.0.40
codegen_flags: <defaults>
</compile_context>

<pallas_src>
import jax
import jax.numpy as jnp
from jax.experimental import pallas as pl
from jax.experimental.pallas import tpu as pltpu


# ---------------------------------------------------------------------------
# Fused kernel: conv+pool GEMM -> batched bidirectional GRU -> Linear
# ---------------------------------------------------------------------------

def _make_fused_kernel(num_layers, hidden_size, seq_len, batch):
    T, B, H = seq_len, batch, hidden_size
    H2 = 2 * hidden_size
    n_gru_refs = 4 * num_layers          # per layer: wih_cat, whh_blk, b_cat, bhh_n_cat

    def kernel(*refs):
        p_ref = refs[0]                   # (B, 4, C_in*K*K, Hp*Wp)  im2col, 4 pool sub-pos
        wc_ref = refs[1]                  # (C_out==T, C_in*K*K)
        bc_ref = refs[2]                  # (C_out, 1)
        gru_refs = refs[3:3 + n_gru_refs]
        wfa_ref = refs[3 + n_gru_refs]    # (2H, C) -- fc weight, bwd rows zeroed
        wfb_ref = refs[4 + n_gru_refs]    # (2H, C) -- fc weight, fwd rows zeroed
        bfc_ref = refs[5 + n_gru_refs]    # (1, C)
        o_ref = refs[6 + n_gru_refs]      # (B, C)

        w_conv = wc_ref[...]
        b_conv = bc_ref[...]

        # ---- Conv2d (im2col GEMM) + MaxPool2d(2), per sample.  Bias is pool-position
        #      independent, so adding it after the max is equivalent. ----
        ys = []
        for b in range(B):
            y = jnp.dot(w_conv, p_ref[b, 0], preferred_element_type=jnp.float32)
            for s in range(1, 4):
                y = jnp.maximum(
                    y, jnp.dot(w_conv, p_ref[b, s],
                               preferred_element_type=jnp.float32))
            ys.append(y + b_conv)         # (T, D) == x.view(B, 10, -1)[b]

        # Time-major batched sequence: row t*B + b  -> (T*B, D).  Built once via
        # static single-row slices (no in-kernel reshape / lane-unaligned slicing).
        x_tm = jnp.concatenate(
            [ys[b][t:t + 1, :] for t in range(T) for b in range(B)], axis=0)

        lane_seq = jax.lax.broadcasted_iota(jnp.int32, (T * B, H2), 1)
        fwd_mask_seq = lane_seq < H                         # fwd lanes [:H]
        lane_row = jax.lax.broadcasted_iota(jnp.int32, (B, H2), 1)
        fwd_mask_row = lane_row < H

        def rev_time(a):
            # reverse the time groups of a time-major (T*B, F) array (one-time shuffle)
            return jnp.concatenate(
                [a[(T - 1 - s) * B:(T - s) * B] for s in range(T)], axis=0)

        h_final = None
        h_first = None
        for layer in range(num_layers):
            wih_ref, whh_ref, bcat_ref, bhhn_ref = gru_refs[layer * 4:layer * 4 + 4]

            # Hoisted input projections: one GEMM per gate for both directions at once
            # (fwd weights in lanes [:H], bwd in [H:]).  Backward direction consumes
            # the time-reversed sequence -> lane-select between gb and rev_time(gb).
            gi = []
            for g in range(3):
                gb = jnp.dot(x_tm, wih_ref[g], preferred_element_type=jnp.float32)
                gb = jnp.where(fwd_mask_seq, gb, rev_time(gb)) + bcat_ref[g]
                gi.append(gb)
            gi_r, gi_z, gi_n = gi

            whh_r = whh_ref[0]            # (2H, 2H) block-diag(fwd, bwd)
            whh_z = whh_ref[1]
            whh_n = whh_ref[2]
            bhh_n = bhhn_ref[...]         # (1, 2H) -- must stay inside r * (.)

            h = jnp.zeros((B, H2), jnp.float32)   # [h_fwd | h_bwd] per sample
            hs = [None] * T
            for s in range(T):            # fully unrolled serial recurrence
                gh_r = jnp.dot(h, whh_r, preferred_element_type=jnp.float32)
                gh_z = jnp.dot(h, whh_z, preferred_element_type=jnp.float32)
                gh_n = jnp.dot(h, whh_n, preferred_element_type=jnp.float32) + bhh_n
                sl = slice(s * B, (s + 1) * B)
                r = jax.nn.sigmoid(gi_r[sl] + gh_r)
                z = jax.nn.sigmoid(gi_z[sl] + gh_z)
                n = jnp.tanh(gi_n[sl] + r * gh_n)
                h = (1.0 - z) * n + z * h
                hs[s] = h

            h_final = hs[T - 1]           # fwd lanes: h_fwd at time T-1
            h_first = hs[0]               # bwd lanes: h_bwd at time T-1

            if layer + 1 < num_layers:
                # next layer input at time t: fwd half from step t, bwd half from
                # step T-1-t (its output at time index t)
                x_tm = jnp.concatenate(
                    [jnp.where(fwd_mask_row, hs[t], hs[T - 1 - t]) for t in range(T)],
                    axis=0)               # (T*B, 2H)

        # fc(out[:, -1, :]):  zero-padded weight halves select the right lanes.
        logits = (jnp.dot(h_final, wfa_ref[...], preferred_element_type=jnp.float32)
                  + jnp.dot(h_first, wfb_ref[...], preferred_element_type=jnp.float32)
                  + bfc_ref[...])
        o_ref[...] = logits.astype(o_ref.dtype)

    return kernel


# ---------------------------------------------------------------------------
# Glue: strided-slice im2col (no gather HLOs) + parameter layout prep
# ---------------------------------------------------------------------------

def _extract_pool_patches(x, kernel_size):
    """im2col patches grouped by 2x2 max-pool sub-position, via strided slices only.

    Returns (B, 4, C_in*K*K, Hp*Wp); row order (ci, kh, kw) matches
    w_conv.reshape(C_out, C_in*K*K).
    """
    B, C_in, Hin, Win = x.shape
    K = kernel_size
    OH, OW = Hin - K + 1, Win - K + 1
    Hp, Wp = OH // 2, OW // 2
    subs = []
    for dh in (0, 1):
        for dw in (0, 1):
            slabs = []
            for kh in range(K):
                for kw in range(K):
                    xs = x[:, :, dh + kh::2, dw + kw::2][:, :, :Hp, :Wp]
                    slabs.append(xs.reshape(B, C_in, Hp * Wp))
            p = jnp.stack(slabs, axis=2)                     # (B, C_in, K*K, Hp*Wp)
            subs.append(p.reshape(B, C_in * K * K, Hp * Wp))
    return jnp.stack(subs, axis=1)                           # (B, 4, CKK, Hp*Wp)


def _prep_gru_layer(fwd, bwd, H):
    """PyTorch per-direction (3H, D)/(3H, H) layout -> direction-fused layout.

    Returns:
      wih_cat (3, D, 2H): per gate, [W_ih_fwd^T | W_ih_bwd^T]
      whh_blk (3, 2H, 2H): per gate, block-diag(W_hh_fwd^T, W_hh_bwd^T)
      b_cat   (3, 1, 2H): b_ih (+ b_hh for r/z) per direction, pre-folded
      bhh_n   (1, 2H): b_hn per direction (kept inside r * (.))
    """
    wih_f, whh_f, bih_f, bhh_f = fwd
    wih_b, whh_b, bih_b, bhh_b = bwd

    def g(w, i):
        return w[i * H:(i + 1) * H]

    wih_cat = jnp.stack(
        [jnp.concatenate([g(wih_f, i).T, g(wih_b, i).T], axis=1) for i in range(3)])
    zeros = jnp.zeros((H, H), jnp.float32)
    whh_blk = jnp.stack([
        jnp.concatenate(
            [jnp.concatenate([g(whh_f, i).T, zeros], axis=1),
             jnp.concatenate([zeros, g(whh_b, i).T], axis=1)], axis=0)
        for i in range(3)])
    b_cat = jnp.stack([
        jnp.concatenate([g(bih_f, 0) + g(bhh_f, 0), g(bih_b, 0) + g(bhh_b, 0)]),  # r
        jnp.concatenate([g(bih_f, 1) + g(bhh_f, 1), g(bih_b, 1) + g(bhh_b, 1)]),  # z
        jnp.concatenate([g(bih_f, 2), g(bih_b, 2)]),                              # n
    ]).reshape(3, 1, 2 * H)
    bhh_n = jnp.concatenate([g(bhh_f, 2), g(bhh_b, 2)]).reshape(1, 2 * H)
    return wih_cat, whh_blk, b_cat, bhh_n


# ---------------------------------------------------------------------------
# Model (deterministic synthetic parameters, PyTorch-style uniform init bounds)
# ---------------------------------------------------------------------------

def _uniform(key, shape, bound):
    return jax.random.uniform(key, shape, jnp.float32, -bound, bound)


class CNNBiGRUPallas:
    def __init__(self, in_channels, out_channels, kernel_size, num_layers,
                 input_size, hidden_size, num_classes, key):
        # The PyTorch module hard-codes x.view(in_size, 10, -1); the sequence layout
        # below relies on out_channels == 10 (channel axis == time axis).
        assert out_channels == 10, "CNNBiGRU's view(B, 10, -1) requires out_channels == 10"

        self.kernel_size = kernel_size
        self.out_channels = out_channels
        self.input_size = input_size
        self.hidden_size = hidden_size
        self.num_layers = num_layers
        self.num_classes = num_classes

        keys = jax.random.split(key, 4 + 8 * num_layers)

        conv_bound = 1.0 / (in_channels * kernel_size * kernel_size) ** 0.5
        w_conv = _uniform(keys[0], (out_channels, in_channels,
                                    kernel_size, kernel_size), conv_bound)
        b_conv = _uniform(keys[1], (out_channels,), conv_bound)
        self.w_conv_mat = w_conv.reshape(out_channels, -1)      # (C_out, C_in*K*K)
        self.b_conv_col = b_conv.reshape(out_channels, 1)

        gru_bound = 1.0 / hidden_size ** 0.5
        self.gru_prepped = []
        ki = 4
        for layer in range(num_layers):
            d_in = input_size if layer == 0 else 2 * hidden_size
            raw = []
            for _ in range(2):                                  # forward, backward
                wih = _uniform(keys[ki + 0], (3 * hidden_size, d_in), gru_bound)
                whh = _uniform(keys[ki + 1], (3 * hidden_size, hidden_size), gru_bound)
                bih = _uniform(keys[ki + 2], (3 * hidden_size,), gru_bound)
                bhh = _uniform(keys[ki + 3], (3 * hidden_size,), gru_bound)
                raw.append((wih, whh, bih, bhh))
                ki += 4
            self.gru_prepped.append(_prep_gru_layer(raw[0], raw[1], hidden_size))

        fc_bound = 1.0 / (2 * hidden_size) ** 0.5
        w_fc = _uniform(keys[2], (num_classes, 2 * hidden_size), fc_bound)
        b_fc = _uniform(keys[3], (num_classes,), fc_bound)
        wt = w_fc.T                                             # (2H, C)
        zh = jnp.zeros((hidden_size, num_classes), jnp.float32)
        self.w_fc_fwd = jnp.concatenate([wt[:hidden_size], zh], axis=0)   # (2H, C)
        self.w_fc_bwd = jnp.concatenate([zh, wt[hidden_size:]], axis=0)   # (2H, C)
        self.b_fc_row = b_fc.reshape(1, num_classes)

    def __call__(self, x):
        B, _, Hin, Win = x.shape
        K = self.kernel_size
        OH, OW = Hin - K + 1, Win - K + 1
        Hp, Wp = OH // 2, OW // 2
        T = 10                                                  # x.view(B, 10, -1)
        D = self.out_channels * Hp * Wp // T
        assert D == Hp * Wp == self.input_size

        patches = _extract_pool_patches(x, K)                   # (B, 4, CKK, Hp*Wp)

        args = [patches, self.w_conv_mat, self.b_conv_col]
        for layer in self.gru_prepped:
            args.extend(layer)
        args += [self.w_fc_fwd, self.w_fc_bwd, self.b_fc_row]

        kernel = _make_fused_kernel(self.num_layers, self.hidden_size, T, B)
        return pl.pallas_call(
            kernel,
            out_shape=jax.ShapeDtypeStruct((B, self.num_classes), jnp.float32),
        )(*args)


# ---------------------------------------------------------------------------

if __name__ == "__main__":
    key = jax.random.PRNGKey(0)
    k_params, k_x = jax.random.split(key)

    # Small shapes consistent with the module's forward:
    # conv 16x16 -> 12x12, pool -> 6x6, view(B, 10, -1) -> T=10, input_size=36.
    in_channels, out_channels, kernel_size = 4, 10, 5
    num_layers, hidden_size, num_classes = 1, 32, 10
    B, Himg, Wimg = 2, 16, 16
    Hp = (Himg - kernel_size + 1) // 2
    Wp = (Wimg - kernel_size + 1) // 2
    input_size = out_channels * Hp * Wp // 10

    model = CNNBiGRUPallas(in_channels, out_channels, kernel_size, num_layers,
                           input_size, hidden_size, num_classes, k_params)

    x = jax.random.normal(k_x, (B, in_channels, Himg, Wimg), jnp.float32)
    out = jax.jit(model.__call__)(x)
    jax.block_until_ready(out)
    assert out.shape == (B, num_classes) and out.dtype == jnp.float32
    assert bool(jnp.all(jnp.isfinite(out)))
    print("KERNEL_OK")
</pallas_src>

<mosaic_0001>
module attributes {stable_mosaic.version = 11 : i64} {
  func.func @kernel(%arg0: memref<2x4x100x36xf32, #tpu.memory_space<vmem>>, %arg1: memref<10x100xf32, #tpu.memory_space<vmem>>, %arg2: memref<10x1xf32, #tpu.memory_space<vmem>>, %arg3: memref<3x36x64xf32, #tpu.memory_space<vmem>>, %arg4: memref<3x64x64xf32, #tpu.memory_space<vmem>>, %arg5: memref<3x1x64xf32, #tpu.memory_space<vmem>>, %arg6: memref<1x64xf32, #tpu.memory_space<vmem>>, %arg7: memref<64x10xf32, #tpu.memory_space<vmem>>, %arg8: memref<64x10xf32, #tpu.memory_space<vmem>>, %arg9: memref<1x10xf32, #tpu.memory_space<vmem>>, %arg10: memref<2x10xf32, #tpu.memory_space<vmem>>) attributes {dimension_semantics = [], scalar_prefetch = 0 : i64, scratch_operands = 0 : i64, tpu.core_type = #tpu.core_type<tc>} {
    %c0 = arith.constant 0 : index
    %c0_0 = arith.constant 0 : index
    %0 = vector.load %arg1[%c0, %c0_0] : memref<10x100xf32, #tpu.memory_space<vmem>>, vector<10x100xf32>
    %c0_1 = arith.constant 0 : index
    %c0_2 = arith.constant 0 : index
    %1 = vector.load %arg2[%c0_1, %c0_2] : memref<10x1xf32, #tpu.memory_space<vmem>>, vector<10x1xf32>
    %c0_3 = arith.constant 0 : index
    %c0_4 = arith.constant 0 : index
    %c0_5 = arith.constant 0 : index
    %c0_6 = arith.constant 0 : index
    %2 = vector.load %arg0[%c0_3, %c0_4, %c0_5, %c0_6] : memref<2x4x100x36xf32, #tpu.memory_space<vmem>>, vector<1x1x100x36xf32>
    %3 = vector.shape_cast %2 : vector<1x1x100x36xf32> to vector<100x36xf32>
    %cst = arith.constant dense<0.000000e+00> : vector<10x36xf32>
    %4 = tpu.matmul %0, %3, %cst {dimension_numbers = #tpu.dot_dimension_numbers<[1], [0], [0], [1], [0, 0, 1, 1], [], []>} : vector<10x100xf32>, vector<100x36xf32>, vector<10x36xf32> -> vector<10x36xf32>
    %c0_7 = arith.constant 0 : index
    %c1 = arith.constant 1 : index
    %c0_8 = arith.constant 0 : index
    %c0_9 = arith.constant 0 : index
    %5 = vector.load %arg0[%c0_7, %c1, %c0_8, %c0_9] : memref<2x4x100x36xf32, #tpu.memory_space<vmem>>, vector<1x1x100x36xf32>
    %6 = vector.shape_cast %5 : vector<1x1x100x36xf32> to vector<100x36xf32>
    %cst_10 = arith.constant dense<0.000000e+00> : vector<10x36xf32>
    %7 = tpu.matmul %0, %6, %cst_10 {dimension_numbers = #tpu.dot_dimension_numbers<[1], [0], [0], [1], [0, 0, 1, 1], [], []>} : vector<10x100xf32>, vector<100x36xf32>, vector<10x36xf32> -> vector<10x36xf32>
    %8 = arith.maximumf %4, %7 : vector<10x36xf32>
    %c0_11 = arith.constant 0 : index
    %c2 = arith.constant 2 : index
    %c0_12 = arith.constant 0 : index
    %c0_13 = arith.constant 0 : index
    %9 = vector.load %arg0[%c0_11, %c2, %c0_12, %c0_13] : memref<2x4x100x36xf32, #tpu.memory_space<vmem>>, vector<1x1x100x36xf32>
    %10 = vector.shape_cast %9 : vector<1x1x100x36xf32> to vector<100x36xf32>
    %cst_14 = arith.constant dense<0.000000e+00> : vector<10x36xf32>
    %11 = tpu.matmul %0, %10, %cst_14 {dimension_numbers = #tpu.dot_dimension_numbers<[1], [0], [0], [1], [0, 0, 1, 1], [], []>} : vector<10x100xf32>, vector<100x36xf32>, vector<10x36xf32> -> vector<10x36xf32>
    %12 = arith.maximumf %8, %11 : vector<10x36xf32>
    %c0_15 = arith.constant 0 : index
    %c3 = arith.constant 3 : index
    %c0_16 = arith.constant 0 : index
    %c0_17 = arith.constant 0 : index
    %13 = vector.load %arg0[%c0_15, %c3, %c0_16, %c0_17] : memref<2x4x100x36xf32, #tpu.memory_space<vmem>>, vector<1x1x100x36xf32>
    %14 = vector.shape_cast %13 : vector<1x1x100x36xf32> to vector<100x36xf32>
    %cst_18 = arith.constant dense<0.000000e+00> : vector<10x36xf32>
    %15 = tpu.matmul %0, %14, %cst_18 {dimension_numbers = #tpu.dot_dimension_numbers<[1], [0], [0], [1], [0, 0, 1, 1], [], []>} : vector<10x100xf32>, vector<100x36xf32>, vector<10x36xf32> -> vector<10x36xf32>
    %16 = arith.maximumf %12, %15 : vector<10x36xf32>
    %17 = vector.broadcast %1 : vector<10x1xf32> to vector<10x36xf32>
    %18 = arith.addf %16, %17 : vector<10x36xf32>
    %c1_19 = arith.constant 1 : index
    %c0_20 = arith.constant 0 : index
    %c0_21 = arith.constant 0 : index
    %c0_22 = arith.constant 0 : index
    %19 = vector.load %arg0[%c1_19, %c0_20, %c0_21, %c0_22] : memref<2x4x100x36xf32, #tpu.memory_space<vmem>>, vector<1x1x100x36xf32>
    %20 = vector.shape_cast %19 : vector<1x1x100x36xf32> to vector<100x36xf32>
    %cst_23 = arith.constant dense<0.000000e+00> : vector<10x36xf32>
    %21 = tpu.matmul %0, %20, %cst_23 {dimension_numbers = #tpu.dot_dimension_numbers<[1], [0], [0], [1], [0, 0, 1, 1], [], []>} : vector<10x100xf32>, vector<100x36xf32>, vector<10x36xf32> -> vector<10x36xf32>
    %c1_24 = arith.constant 1 : index
    %c1_25 = arith.constant 1 : index
    %c0_26 = arith.constant 0 : index
    %c0_27 = arith.constant 0 : index
    %22 = vector.load %arg0[%c1_24, %c1_25, %c0_26, %c0_27] : memref<2x4x100x36xf32, #tpu.memory_space<vmem>>, vector<1x1x100x36xf32>
    %23 = vector.shape_cast %22 : vector<1x1x100x36xf32> to vector<100x36xf32>
    %cst_28 = arith.constant dense<0.000000e+00> : vector<10x36xf32>
    %24 = tpu.matmul %0, %23, %cst_28 {dimension_numbers = #tpu.dot_dimension_numbers<[1], [0], [0], [1], [0, 0, 1, 1], [], []>} : vector<10x100xf32>, vector<100x36xf32>, vector<10x36xf32> -> vector<10x36xf32>
    %25 = arith.maximumf %21, %24 : vector<10x36xf32>
    %c1_29 = arith.constant 1 : index
    %c2_30 = arith.constant 2 : index
    %c0_31 = arith.constant 0 : index
    %c0_32 = arith.constant 0 : index
    %26 = vector.load %arg0[%c1_29, %c2_30, %c0_31, %c0_32] : memref<2x4x100x36xf32, #tpu.memory_space<vmem>>, vector<1x1x100x36xf32>
    %27 = vector.shape_cast %26 : vector<1x1x100x36xf32> to vector<100x36xf32>
    %cst_33 = arith.constant dense<0.000000e+00> : vector<10x36xf32>
    %28 = tpu.matmul %0, %27, %cst_33 {dimension_numbers = #tpu.dot_dimension_numbers<[1], [0], [0], [1], [0, 0, 1, 1], [], []>} : vector<10x100xf32>, vector<100x36xf32>, vector<10x36xf32> -> vector<10x36xf32>
    %29 = arith.maximumf %25, %28 : vector<10x36xf32>
    %c1_34 = arith.constant 1 : index
    %c3_35 = arith.constant 3 : index
    %c0_36 = arith.constant 0 : index
    %c0_37 = arith.constant 0 : index
    %30 = vector.load %arg0[%c1_34, %c3_35, %c0_36, %c0_37] : memref<2x4x100x36xf32, #tpu.memory_space<vmem>>, vector<1x1x100x36xf32>
    %31 = vector.shape_cast %30 : vector<1x1x100x36xf32> to vector<100x36xf32>
    %cst_38 = arith.constant dense<0.000000e+00> : vector<10x36xf32>
    %32 = tpu.matmul %0, %31, %cst_38 {dimension_numbers = #tpu.dot_dimension_numbers<[1], [0], [0], [1], [0, 0, 1, 1], [], []>} : vector<10x100xf32>, vector<100x36xf32>, vector<10x36xf32> -> vector<10x36xf32>
    %33 = arith.maximumf %29, %32 : vector<10x36xf32>
    %34 = vector.broadcast %1 : vector<10x1xf32> to vector<10x36xf32>
    %35 = arith.addf %33, %34 : vector<10x36xf32>
    %36 = vector.extract_strided_slice %18 {offsets = [0, 0], sizes = [1, 36], strides = [1, 1]} : vector<10x36xf32> to vector<1x36xf32>
    %37 = vector.extract_strided_slice %35 {offsets = [0, 0], sizes = [1, 36], strides = [1, 1]} : vector<10x36xf32> to vector<1x36xf32>
    %38 = vector.extract_strided_slice %18 {offsets = [1, 0], sizes = [1, 36], strides = [1, 1]} : vector<10x36xf32> to vector<1x36xf32>
    %39 = vector.extract_strided_slice %35 {offsets = [1, 0], sizes = [1, 36], strides = [1, 1]} : vector<10x36xf32> to vector<1x36xf32>
    %40 = vector.extract_strided_slice %18 {offsets = [2, 0], sizes = [1, 36], strides = [1, 1]} : vector<10x36xf32> to vector<1x36xf32>
    %41 = vector.extract_strided_slice %35 {offsets = [2, 0], sizes = [1, 36], strides = [1, 1]} : vector<10x36xf32> to vector<1x36xf32>
    %42 = vector.extract_strided_slice %18 {offsets = [3, 0], sizes = [1, 36], strides = [1, 1]} : vector<10x36xf32> to vector<1x36xf32>
    %43 = vector.extract_strided_slice %35 {offsets = [3, 0], sizes = [1, 36], strides = [1, 1]} : vector<10x36xf32> to vector<1x36xf32>
    %44 = vector.extract_strided_slice %18 {offsets = [4, 0], sizes = [1, 36], strides = [1, 1]} : vector<10x36xf32> to vector<1x36xf32>
    %45 = vector.extract_strided_slice %35 {offsets = [4, 0], sizes = [1, 36], strides = [1, 1]} : vector<10x36xf32> to vector<1x36xf32>
    %46 = vector.extract_strided_slice %18 {offsets = [5, 0], sizes = [1, 36], strides = [1, 1]} : vector<10x36xf32> to vector<1x36xf32>
    %47 = vector.extract_strided_slice %35 {offsets = [5, 0], sizes = [1, 36], strides = [1, 1]} : vector<10x36xf32> to vector<1x36xf32>
    %48 = vector.extract_strided_slice %18 {offsets = [6, 0], sizes = [1, 36], strides = [1, 1]} : vector<10x36xf32> to vector<1x36xf32>
    %49 = vector.extract_strided_slice %35 {offsets = [6, 0], sizes = [1, 36], strides = [1, 1]} : vector<10x36xf32> to vector<1x36xf32>
    %50 = vector.extract_strided_slice %18 {offsets = [7, 0], sizes = [1, 36], strides = [1, 1]} : vector<10x36xf32> to vector<1x36xf32>
    %51 = vector.extract_strided_slice %35 {offsets = [7, 0], sizes = [1, 36], strides = [1, 1]} : vector<10x36xf32> to vector<1x36xf32>
    %52 = vector.extract_strided_slice %18 {offsets = [8, 0], sizes = [1, 36], strides = [1, 1]} : vector<10x36xf32> to vector<1x36xf32>
    %53 = vector.extract_strided_slice %35 {offsets = [8, 0], sizes = [1, 36], strides = [1, 1]} : vector<10x36xf32> to vector<1x36xf32>
    %54 = vector.extract_strided_slice %18 {offsets = [9, 0], sizes = [1, 36], strides = [1, 1]} : vector<10x36xf32> to vector<1x36xf32>
    %55 = vector.extract_strided_slice %35 {offsets = [9, 0], sizes = [1, 36], strides = [1, 1]} : vector<10x36xf32> to vector<1x36xf32>
    %56 = tpu.concatenate %36, %37, %38, %39, %40, %41, %42, %43, %44, %45, %46, %47, %48, %49, %50, %51 in 0 : vector<1x36xf32>, vector<1x36xf32>, vector<1x36xf32>, vector<1x36xf32>, vector<1x36xf32>, vector<1x36xf32>, vector<1x36xf32>, vector<1x36xf32>, vector<1x36xf32>, vector<1x36xf32>, vector<1x36xf32>, vector<1x36xf32>, vector<1x36xf32>, vector<1x36xf32>, vector<1x36xf32>, vector<1x36xf32> -> vector<16x36xf32>
    %57 = tpu.concatenate %52, %53, %54, %55 in 0 : vector<1x36xf32>, vector<1x36xf32>, vector<1x36xf32>, vector<1x36xf32> -> vector<4x36xf32>
    %58 = tpu.concatenate %56, %57 in 0 : vector<16x36xf32>, vector<4x36xf32> -> vector<20x36xf32>
    %59 = tpu.iota {dimensions = array<i32: 1>} : vector<20x64xi32>
    %c32_i32 = arith.constant 32 : i32
    %60 = vector.broadcast %c32_i32 : i32 to vector<20x64xi32>
    %61 = arith.cmpi slt, %59, %60 : vector<20x64xi32>
    %c0_39 = arith.constant 0 : index
    %c0_40 = arith.constant 0 : index
    %c0_41 = arith.constant 0 : index
    %62 = vector.load %arg3[%c0_39, %c0_40, %c0_41] : memref<3x36x64xf32, #tpu.memory_space<vmem>>, vector<1x36x64xf32>
    %63 = vector.shape_cast %62 : vector<1x36x64xf32> to vector<36x64xf32>
    %cst_42 = arith.constant dense<0.000000e+00> : vector<20x64xf32>
    %64 = tpu.matmul %58, %63, %cst_42 {dimension_numbers = #tpu.dot_dimension_numbers<[1], [0], [0], [1], [0, 0, 1, 1], [], []>} : vector<20x36xf32>, vector<36x64xf32>, vector<20x64xf32> -> vector<20x64xf32>
    %65 = vector.extract_strided_slice %64 {offsets = [18, 0], sizes = [2, 64], strides = [1, 1]} : vector<20x64xf32> to vector<2x64xf32>
    %66 = vector.extract_strided_slice %64 {offsets = [16, 0], sizes = [2, 64], strides = [1, 1]} : vector<20x64xf32> to vector<2x64xf32>
    %67 = vector.extract_strided_slice %64 {offsets = [14, 0], sizes = [2, 64], strides = [1, 1]} : vector<20x64xf32> to vector<2x64xf32>
    %68 = vector.extract_strided_slice %64 {offsets = [12, 0], sizes = [2, 64], strides = [1, 1]} : vector<20x64xf32> to vector<2x64xf32>
    %69 = vector.extract_strided_slice %64 {offsets = [10, 0], sizes = [2, 64], strides = [1, 1]} : vector<20x64xf32> to vector<2x64xf32>
    %70 = vector.extract_strided_slice %64 {offsets = [8, 0], sizes = [2, 64], strides = [1, 1]} : vector<20x64xf32> to vector<2x64xf32>
    %71 = vector.extract_strided_slice %64 {offsets = [6, 0], sizes = [2, 64], strides = [1, 1]} : vector<20x64xf32> to vector<2x64xf32>
    %72 = vector.extract_strided_slice %64 {offsets = [4, 0], sizes = [2, 64], strides = [1, 1]} : vector<20x64xf32> to vector<2x64xf32>
    %73 = vector.extract_strided_slice %64 {offsets = [2, 0], sizes = [2, 64], strides = [1, 1]} : vector<20x64xf32> to vector<2x64xf32>
    %74 = vector.extract_strided_slice %64 {offsets = [0, 0], sizes = [2, 64], strides = [1, 1]} : vector<20x64xf32> to vector<2x64xf32>
    %75 = tpu.concatenate %65, %66, %67, %68, %69, %70, %71, %72, %73, %74 in 0 : vector<2x64xf32>, vector<2x64xf32>, vector<2x64xf32>, vector<2x64xf32>, vector<2x64xf32>, vector<2x64xf32>, vector<2x64xf32>, vector<2x64xf32>, vector<2x64xf32>, vector<2x64xf32> -> vector<20x64xf32>
    %76 = arith.select %61, %64, %75 : vector<20x64xi1>, vector<20x64xf32>
    %c0_43 = arith.constant 0 : index
    %c0_44 = arith.constant 0 : index
    %c0_45 = arith.constant 0 : index
    %77 = vector.load %arg5[%c0_43, %c0_44, %c0_45] : memref<3x1x64xf32, #tpu.memory_space<vmem>>, vector<1x1x64xf32>
    %78 = vector.shape_cast %77 : vector<1x1x64xf32> to vector<1x64xf32>
    %79 = vector.broadcast %78 : vector<1x64xf32> to vector<20x64xf32>
    %80 = arith.addf %76, %79 : vector<20x64xf32>
    %c1_46 = arith.constant 1 : index
    %c0_47 = arith.constant 0 : index
    %c0_48 = arith.constant 0 : index
    %81 = vector.load %arg3[%c1_46, %c0_47, %c0_48] : memref<3x36x64xf32, #tpu.memory_space<vmem>>, vector<1x36x64xf32>
    %82 = vector.shape_cast %81 : vector<1x36x64xf32> to vector<36x64xf32>
    %cst_49 = arith.constant dense<0.000000e+00> : vector<20x64xf32>
    %83 = tpu.matmul %58, %82, %cst_49 {dimension_numbers = #tpu.dot_dimension_numbers<[1], [0], [0], [1], [0, 0, 1, 1], [], []>} : vector<20x36xf32>, vector<36x64xf32>, vector<20x64xf32> -> vector<20x64xf32>
    %84 = vector.extract_strided_slice %83 {offsets = [18, 0], sizes = [2, 64], strides = [1, 1]} : vector<20x64xf32> to vector<2x64xf32>
    %85 = vector.extract_strided_slice %83 {offsets = [16, 0], sizes = [2, 64], strides = [1, 1]} : vector<20x64xf32> to vector<2x64xf32>
    %86 = vector.extract_strided_slice %83 {offsets = [14, 0], sizes = [2, 64], strides = [1, 1]} : vector<20x64xf32> to vector<2x64xf32>
    %87 = vector.extract_strided_slice %83 {offsets = [12, 0], sizes = [2, 64], strides = [1, 1]} : vector<20x64xf32> to vector<2x64xf32>
    %88 = vector.extract_strided_slice %83 {offsets = [10, 0], sizes = [2, 64], strides = [1, 1]} : vector<20x64xf32> to vector<2x64xf32>
    %89 = vector.extract_strided_slice %83 {offsets = [8, 0], sizes = [2, 64], strides = [1, 1]} : vector<20x64xf32> to vector<2x64xf32>
    %90 = vector.extract_strided_slice %83 {offsets = [6, 0], sizes = [2, 64], strides = [1, 1]} : vector<20x64xf32> to vector<2x64xf32>
    %91 = vector.extract_strided_slice %83 {offsets = [4, 0], sizes = [2, 64], strides = [1, 1]} : vector<20x64xf32> to vector<2x64xf32>
    %92 = vector.extract_strided_slice %83 {offsets = [2, 0], sizes = [2, 64], strides = [1, 1]} : vector<20x64xf32> to vector<2x64xf32>
    %93 = vector.extract_strided_slice %83 {offsets = [0, 0], sizes = [2, 64], strides = [1, 1]} : vector<20x64xf32> to vector<2x64xf32>
    %94 = tpu.concatenate %84, %85, %86, %87, %88, %89, %90, %91, %92, %93 in 0 : vector<2x64xf32>, vector<2x64xf32>, vector<2x64xf32>, vector<2x64xf32>, vector<2x64xf32>, vector<2x64xf32>, vector<2x64xf32>, vector<2x64xf32>, vector<2x64xf32>, vector<2x64xf32> -> vector<20x64xf32>
    %95 = arith.select %61, %83, %94 : vector<20x64xi1>, vector<20x64xf32>
    %c1_50 = arith.constant 1 : index
    %c0_51 = arith.constant 0 : index
    %c0_52 = arith.constant 0 : index
    %96 = vector.load %arg5[%c1_50, %c0_51, %c0_52] : memref<3x1x64xf32, #tpu.memory_space<vmem>>, vector<1x1x64xf32>
    %97 = vector.shape_cast %96 : vector<1x1x64xf32> to vector<1x64xf32>
    %98 = vector.broadcast %97 : vector<1x64xf32> to vector<20x64xf32>
    %99 = arith.addf %95, %98 : vector<20x64xf32>
    %c2_53 = arith.constant 2 : index
    %c0_54 = arith.constant 0 : index
    %c0_55 = arith.constant 0 : index
    %100 = vector.load %arg3[%c2_53, %c0_54, %c0_55] : memref<3x36x64xf32, #tpu.memory_space<vmem>>, vector<1x36x64xf32>
    %101 = vector.shape_cast %100 : vector<1x36x64xf32> to vector<36x64xf32>
    %cst_56 = arith.constant dense<0.000000e+00> : vector<20x64xf32>
    %102 = tpu.matmul %58, %101, %cst_56 {dimension_numbers = #tpu.dot_dimension_numbers<[1], [0], [0], [1], [0, 0, 1, 1], [], []>} : vector<20x36xf32>, vector<36x64xf32>, vector<20x64xf32> -> vector<20x64xf32>
    %103 = vector.extract_strided_slice %102 {offsets = [18, 0], sizes = [2, 64], strides = [1, 1]} : vector<20x64xf32> to vector<2x64xf32>
    %104 = vector.extract_strided_slice %102 {offsets = [16, 0], sizes = [2, 64], strides = [1, 1]} : vector<20x64xf32> to vector<2x64xf32>
    %105 = vector.extract_strided_slice %102 {offsets = [14, 0], sizes = [2, 64], strides = [1, 1]} : vector<20x64xf32> to vector<2x64xf32>
    %106 = vector.extract_strided_slice %102 {offsets = [12, 0], sizes = [2, 64], strides = [1, 1]} : vector<20x64xf32> to vector<2x64xf32>
    %107 = vector.extract_strided_slice %102 {offsets = [10, 0], sizes = [2, 64], strides = [1, 1]} : vector<20x64xf32> to vector<2x64xf32>
    %108 = vector.extract_strided_slice %102 {offsets = [8, 0], sizes = [2, 64], strides = [1, 1]} : vector<20x64xf32> to vector<2x64xf32>
    %109 = vector.extract_strided_slice %102 {offsets = [6, 0], sizes = [2, 64], strides = [1, 1]} : vector<20x64xf32> to vector<2x64xf32>
    %110 = vector.extract_strided_slice %102 {offsets = [4, 0], sizes = [2, 64], strides = [1, 1]} : vector<20x64xf32> to vector<2x64xf32>
    %111 = vector.extract_strided_slice %102 {offsets = [2, 0], sizes = [2, 64], strides = [1, 1]} : vector<20x64xf32> to vector<2x64xf32>
    %112 = vector.extract_strided_slice %102 {offsets = [0, 0], sizes = [2, 64], strides = [1, 1]} : vector<20x64xf32> to vector<2x64xf32>
    %113 = tpu.concatenate %103, %104, %105, %106, %107, %108, %109, %110, %111, %112 in 0 : vector<2x64xf32>, vector<2x64xf32>, vector<2x64xf32>, vector<2x64xf32>, vector<2x64xf32>, vector<2x64xf32>, vector<2x64xf32>, vector<2x64xf32>, vector<2x64xf32>, vector<2x64xf32> -> vector<20x64xf32>
    %114 = arith.select %61, %102, %113 : vector<20x64xi1>, vector<20x64xf32>
    %c2_57 = arith.constant 2 : index
    %c0_58 = arith.constant 0 : index
    %c0_59 = arith.constant 0 : index
    %115 = vector.load %arg5[%c2_57, %c0_58, %c0_59] : memref<3x1x64xf32, #tpu.memory_space<vmem>>, vector<1x1x64xf32>
    %116 = vector.shape_cast %115 : vector<1x1x64xf32> to vector<1x64xf32>
    %117 = vector.broadcast %116 : vector<1x64xf32> to vector<20x64xf32>
    %118 = arith.addf %114, %117 : vector<20x64xf32>
    %c0_60 = arith.constant 0 : index
    %c0_61 = arith.constant 0 : index
    %c0_62 = arith.constant 0 : index
    %119 = vector.load %arg4[%c0_60, %c0_61, %c0_62] : memref<3x64x64xf32, #tpu.memory_space<vmem>>, vector<1x64x64xf32>
    %120 = vector.shape_cast %119 : vector<1x64x64xf32> to vector<64x64xf32>
    %c1_63 = arith.constant 1 : index
    %c0_64 = arith.constant 0 : index
    %c0_65 = arith.constant 0 : index
    %121 = vector.load %arg4[%c1_63, %c0_64, %c0_65] : memref<3x64x64xf32, #tpu.memory_space<vmem>>, vector<1x64x64xf32>
    %122 = vector.shape_cast %121 : vector<1x64x64xf32> to vector<64x64xf32>
    %c2_66 = arith.constant 2 : index
    %c0_67 = arith.constant 0 : index
    %c0_68 = arith.constant 0 : index
    %123 = vector.load %arg4[%c2_66, %c0_67, %c0_68] : memref<3x64x64xf32, #tpu.memory_space<vmem>>, vector<1x64x64xf32>
    %124 = vector.shape_cast %123 : vector<1x64x64xf32> to vector<64x64xf32>
    %c0_69 = arith.constant 0 : index
    %c0_70 = arith.constant 0 : index
    %125 = vector.load %arg6[%c0_69, %c0_70] : memref<1x64xf32, #tpu.memory_space<vmem>>, vector<1x64xf32>
    %cst_71 = arith.constant 0.000000e+00 : f32
    %126 = vector.broadcast %cst_71 : f32 to vector<2x64xf32>
    %cst_72 = arith.constant dense<0.000000e+00> : vector<2x64xf32>
    %127 = tpu.matmul %126, %120, %cst_72 {dimension_numbers = #tpu.dot_dimension_numbers<[1], [0], [0], [1], [0, 0, 1, 1], [], []>} : vector<2x64xf32>, vector<64x64xf32>, vector<2x64xf32> -> vector<2x64xf32>
    %cst_73 = arith.constant dense<0.000000e+00> : vector<2x64xf32>
    %128 = tpu.matmul %126, %122, %cst_73 {dimension_numbers = #tpu.dot_dimension_numbers<[1], [0], [0], [1], [0, 0, 1, 1], [], []>} : vector<2x64xf32>, vector<64x64xf32>, vector<2x64xf32> -> vector<2x64xf32>
    %cst_74 = arith.constant dense<0.000000e+00> : vector<2x64xf32>
    %129 = tpu.matmul %126, %124, %cst_74 {dimension_numbers = #tpu.dot_dimension_numbers<[1], [0], [0], [1], [0, 0, 1, 1], [], []>} : vector<2x64xf32>, vector<64x64xf32>, vector<2x64xf32> -> vector<2x64xf32>
    %130 = vector.broadcast %125 : vector<1x64xf32> to vector<2x64xf32>
    %131 = arith.addf %129, %130 : vector<2x64xf32>
    %132 = vector.extract_strided_slice %80 {offsets = [0, 0], sizes = [2, 64], strides = [1, 1]} : vector<20x64xf32> to vector<2x64xf32>
    %133 = arith.addf %132, %127 : vector<2x64xf32>
    %134 = arith.negf %133 : vector<2x64xf32>
    %135 = math.exp %134 : vector<2x64xf32>
    %cst_75 = arith.constant 1.000000e+00 : f32
    %136 = vector.broadcast %cst_75 : f32 to vector<2x64xf32>
    %137 = arith.addf %136, %135 : vector<2x64xf32>
    %138 = arith.divf %136, %137 : vector<2x64xf32>
    %139 = vector.extract_strided_slice %99 {offsets = [0, 0], sizes = [2, 64], strides = [1, 1]} : vector<20x64xf32> to vector<2x64xf32>
    %140 = arith.addf %139, %128 : vector<2x64xf32>
    %141 = arith.negf %140 : vector<2x64xf32>
    %142 = math.exp %141 : vector<2x64xf32>
    %cst_76 = arith.constant 1.000000e+00 : f32
    %143 = vector.broadcast %cst_76 : f32 to vector<2x64xf32>
    %144 = arith.addf %143, %142 : vector<2x64xf32>
    %145 = arith.divf %143, %144 : vector<2x64xf32>
    %146 = vector.extract_strided_slice %118 {offsets = [0, 0], sizes = [2, 64], strides = [1, 1]} : vector<20x64xf32> to vector<2x64xf32>
    %147 = arith.mulf %138, %131 : vector<2x64xf32>
    %148 = arith.addf %146, %147 : vector<2x64xf32>
    %149 = math.tanh %148 : vector<2x64xf32>
    %cst_77 = arith.constant 1.000000e+00 : f32
    %150 = vector.broadcast %cst_77 : f32 to vector<2x64xf32>
    %151 = arith.subf %150, %145 : vector<2x64xf32>
    %152 = arith.mulf %151, %149 : vector<2x64xf32>
    %153 = arith.mulf %145, %126 : vector<2x64xf32>
    %154 = arith.addf %152, %153 : vector<2x64xf32>
    %cst_78 = arith.constant dense<0.000000e+00> : vector<2x64xf32>
    %155 = tpu.matmul %154, %120, %cst_78 {dimension_numbers = #tpu.dot_dimension_numbers<[1], [0], [0], [1], [0, 0, 1, 1], [], []>} : vector<2x64xf32>, vector<64x64xf32>, vector<2x64xf32> -> vector<2x64xf32>
    %cst_79 = arith.constant dense<0.000000e+00> : vector<2x64xf32>
    %156 = tpu.matmul %154, %122, %cst_79 {dimension_numbers = #tpu.dot_dimension_numbers<[1], [0], [0], [1], [0, 0, 1, 1], [], []>} : vector<2x64xf32>, vector<64x64xf32>, vector<2x64xf32> -> vector<2x64xf32>
    %cst_80 = arith.constant dense<0.000000e+00> : vector<2x64xf32>
    %157 = tpu.matmul %154, %124, %cst_80 {dimension_numbers = #tpu.dot_dimension_numbers<[1], [0], [0], [1], [0, 0, 1, 1], [], []>} : vector<2x64xf32>, vector<64x64xf32>, vector<2x64xf32> -> vector<2x64xf32>
    %158 = vector.broadcast %125 : vector<1x64xf32> to vector<2x64xf32>
    %159 = arith.addf %157, %158 : vector<2x64xf32>
    %160 = vector.extract_strided_slice %80 {offsets = [2, 0], sizes = [2, 64], strides = [1, 1]} : vector<20x64xf32> to vector<2x64xf32>
    %161 = arith.addf %160, %155 : vector<2x64xf32>
    %162 = arith.negf %161 : vector<2x64xf32>
    %163 = math.exp %162 : vector<2x64xf32>
    %cst_81 = arith.constant 1.000000e+00 : f32
    %164 = vector.broadcast %cst_81 : f32 to vector<2x64xf32>
    %165 = arith.addf %164, %163 : vector<2x64xf32>
    %166 = arith.divf %164, %165 : vector<2x64xf32>
    %167 = vector.extract_strided_slice %99 {offsets = [2, 0], sizes = [2, 64], strides = [1, 1]} : vector<20x64xf32> to vector<2x64xf32>
    %168 = arith.addf %167, %156 : vector<2x64xf32>
    %169 = arith.negf %168 : vector<2x64xf32>
    %170 = math.exp %169 : vector<2x64xf32>
    %cst_82 = arith.constant 1.000000e+00 : f32
    %171 = vector.broadcast %cst_82 : f32 to vector<2x64xf32>
    %172 = arith.addf %171, %170 : vector<2x64xf32>
    %173 = arith.divf %171, %172 : vector<2x64xf32>
    %174 = vector.extract_strided_slice %118 {offsets = [2, 0], sizes = [2, 64], strides = [1, 1]} : vector<20x64xf32> to vector<2x64xf32>
    %175 = arith.mulf %166, %159 : vector<2x64xf32>
    %176 = arith.addf %174, %175 : vector<2x64xf32>
    %177 = math.tanh %176 : vector<2x64xf32>
    %cst_83 = arith.constant 1.000000e+00 : f32
    %178 = vector.broadcast %cst_83 : f32 to vector<2x64xf32>
    %179 = arith.subf %178, %173 : vector<2x64xf32>
    %180 = arith.mulf %179, %177 : vector<2x64xf32>
    %181 = arith.mulf %173, %154 : vector<2x64xf32>
    %182 = arith.addf %180, %181 : vector<2x64xf32>
    %cst_84 = arith.constant dense<0.000000e+00> : vector<2x64xf32>
    %183 = tpu.matmul %182, %120, %cst_84 {dimension_numbers = #tpu.dot_dimension_numbers<[1], [0], [0], [1], [0, 0, 1, 1], [], []>} : vector<2x64xf32>, vector<64x64xf32>, vector<2x64xf32> -> vector<2x64xf32>
    %cst_85 = arith.constant dense<0.000000e+00> : vector<2x64xf32>
    %184 = tpu.matmul %182, %122, %cst_85 {dimension_numbers = #tpu.dot_dimension_numbers<[1], [0], [0], [1], [0, 0, 1, 1], [], []>} : vector<2x64xf32>, vector<64x64xf32>, vector<2x64xf32> -> vector<2x64xf32>
    %cst_86 = arith.constant dense<0.000000e+00> : vector<2x64xf32>
    %185 = tpu.matmul %182, %124, %cst_86 {dimension_numbers = #tpu.dot_dimension_numbers<[1], [0], [0], [1], [0, 0, 1, 1], [], []>} : vector<2x64xf32>, vector<64x64xf32>, vector<2x64xf32> -> vector<2x64xf32>
    %186 = vector.broadcast %125 : vector<1x64xf32> to vector<2x64xf32>
    %187 = arith.addf %185, %186 : vector<2x64xf32>
    %188 = vector.extract_strided_slice %80 {offsets = [4, 0], sizes = [2, 64], strides = [1, 1]} : vector<20x64xf32> to vector<2x64xf32>
    %189 = arith.addf %188, %183 : vector<2x64xf32>
    %190 = arith.negf %189 : vector<2x64xf32>
    %191 = math.exp %190 : vector<2x64xf32>
    %cst_87 = arith.constant 1.000000e+00 : f32
    %192 = vector.broadcast %cst_87 : f32 to vector<2x64xf32>
    %193 = arith.addf %192, %191 : vector<2x64xf32>
    %194 = arith.divf %192, %193 : vector<2x64xf32>
    %195 = vector.extract_strided_slice %99 {offsets = [4, 0], sizes = [2, 64], strides = [1, 1]} : vector<20x64xf32> to vector<2x64xf32>
    %196 = arith.addf %195, %184 : vector<2x64xf32>
    %197 = arith.negf %196 : vector<2x64xf32>
    %198 = math.exp %197 : vector<2x64xf32>
    %cst_88 = arith.constant 1.000000e+00 : f32
    %199 = vector.broadcast %cst_88 : f32 to vector<2x64xf32>
    %200 = arith.addf %199, %198 : vector<2x64xf32>
    %201 = arith.divf %199, %200 : vector<2x64xf32>
    %202 = vector.extract_strided_slice %118 {offsets = [4, 0], sizes = [2, 64], strides = [1, 1]} : vector<20x64xf32> to vector<2x64xf32>
    %203 = arith.mulf %194, %187 : vector<2x64xf32>
    %204 = arith.addf %202, %203 : vector<2x64xf32>
    %205 = math.tanh %204 : vector<2x64xf32>
    %cst_89 = arith.constant 1.000000e+00 : f32
    %206 = vector.broadcast %cst_89 : f32 to vector<2x64xf32>
    %207 = arith.subf %206, %201 : vector<2x64xf32>
    %208 = arith.mulf %207, %205 : vector<2x64xf32>
    %209 = arith.mulf %201, %182 : vector<2x64xf32>
    %210 = arith.addf %208, %209 : vector<2x64xf32>
    %cst_90 = arith.constant dense<0.000000e+00> : vector<2x64xf32>
    %211 = tpu.matmul %210, %120, %cst_90 {dimension_numbers = #tpu.dot_dimension_numbers<[1], [0], [0], [1], [0, 0, 1, 1], [], []>} : vector<2x64xf32>, vector<64x64xf32>, vector<2x64xf32> -> vector<2x64xf32>
    %cst_91 = arith.constant dense<0.000000e+00> : vector<2x64xf32>
    %212 = tpu.matmul %210, %122, %cst_91 {dimension_numbers = #tpu.dot_dimension_numbers<[1], [0], [0], [1], [0, 0, 1, 1], [], []>} : vector<2x64xf32>, vector<64x64xf32>, vector<2x64xf32> -> vector<2x64xf32>
    %cst_92 = arith.constant dense<0.000000e+00> : vector<2x64xf32>
    %213 = tpu.matmul %210, %124, %cst_92 {dimension_numbers = #tpu.dot_dimension_numbers<[1], [0], [0], [1], [0, 0, 1, 1], [], []>} : vector<2x64xf32>, vector<64x64xf32>, vector<2x64xf32> -> vector<2x64xf32>
    %214 = vector.broadcast %125 : vector<1x64xf32> to vector<2x64xf32>
    %215 = arith.addf %213, %214 : vector<2x64xf32>
    %216 = vector.extract_strided_slice %80 {offsets = [6, 0], sizes = [2, 64], strides = [1, 1]} : vector<20x64xf32> to vector<2x64xf32>
    %217 = arith.addf %216, %211 : vector<2x64xf32>
    %218 = arith.negf %217 : vector<2x64xf32>
    %219 = math.exp %218 : vector<2x64xf32>
    %cst_93 = arith.constant 1.000000e+00 : f32
    %220 = vector.broadcast %cst_93 : f32 to vector<2x64xf32>
    %221 = arith.addf %220, %219 : vector<2x64xf32>
    %222 = arith.divf %220, %221 : vector<2x64xf32>
    %223 = vector.extract_strided_slice %99 {offsets = [6, 0], sizes = [2, 64], strides = [1, 1]} : vector<20x64xf32> to vector<2x64xf32>
    %224 = arith.addf %223, %212 : vector<2x64xf32>
    %225 = arith.negf %224 : vector<2x64xf32>
    %226 = math.exp %225 : vector<2x64xf32>
    %cst_94 = arith.constant 1.000000e+00 : f32
    %227 = vector.broadcast %cst_94 : f32 to vector<2x64xf32>
    %228 = arith.addf %227, %226 : vector<2x64xf32>
    %229 = arith.divf %227, %228 : vector<2x64xf32>
    %230 = vector.extract_strided_slice %118 {offsets = [6, 0], sizes = [2, 64], strides = [1, 1]} : vector<20x64xf32> to vector<2x64xf32>
    %231 = arith.mulf %222, %215 : vector<2x64xf32>
    %232 = arith.addf %230, %231 : vector<2x64xf32>
    %233 = math.tanh %232 : vector<2x64xf32>
    %cst_95 = arith.constant 1.000000e+00 : f32
    %234 = vector.broadcast %cst_95 : f32 to vector<2x64xf32>
    %235 = arith.subf %234, %229 : vector<2x64xf32>
    %236 = arith.mulf %235, %233 : vector<2x64xf32>
    %237 = arith.mulf %229, %210 : vector<2x64xf32>
    %238 = arith.addf %236, %237 : vector<2x64xf32>
    %cst_96 = arith.constant dense<0.000000e+00> : vector<2x64xf32>
    %239 = tpu.matmul %238, %120, %cst_96 {dimension_numbers = #tpu.dot_dimension_numbers<[1], [0], [0], [1], [0, 0, 1, 1], [], []>} : vector<2x64xf32>, vector<64x64xf32>, vector<2x64xf32> -> vector<2x64xf32>
    %cst_97 = arith.constant dense<0.000000e+00> : vector<2x64xf32>
    %240 = tpu.matmul %238, %122, %cst_97 {dimension_numbers = #tpu.dot_dimension_numbers<[1], [0], [0], [1], [0, 0, 1, 1], [], []>} : vector<2x64xf32>, vector<64x64xf32>, vector<2x64xf32> -> vector<2x64xf32>
    %cst_98 = arith.constant dense<0.000000e+00> : vector<2x64xf32>
    %241 = tpu.matmul %238, %124, %cst_98 {dimension_numbers = #tpu.dot_dimension_numbers<[1], [0], [0], [1], [0, 0, 1, 1], [], []>} : vector<2x64xf32>, vector<64x64xf32>, vector<2x64xf32> -> vector<2x64xf32>
    %242 = vector.broadcast %125 : vector<1x64xf32> to vector<2x64xf32>
    %243 = arith.addf %241, %242 : vector<2x64xf32>
    %244 = vector.extract_strided_slice %80 {offsets = [8, 0], sizes = [2, 64], strides = [1, 1]} : vector<20x64xf32> to vector<2x64xf32>
    %245 = arith.addf %244, %239 : vector<2x64xf32>
    %246 = arith.negf %245 : vector<2x64xf32>
    %247 = math.exp %246 : vector<2x64xf32>
    %cst_99 = arith.constant 1.000000e+00 : f32
    %248 = vector.broadcast %cst_99 : f32 to vector<2x64xf32>
    %249 = arith.addf %248, %247 : vector<2x64xf32>
    %250 = arith.divf %248, %249 : vector<2x64xf32>
    %251 = vector.extract_strided_slice %99 {offsets = [8, 0], sizes = [2, 64], strides = [1, 1]} : vector<20x64xf32> to vector<2x64xf32>
    %252 = arith.addf %251, %240 : vector<2x64xf32>
    %253 = arith.negf %252 : vector<2x64xf32>
    %254 = math.exp %253 : vector<2x64xf32>
    %cst_100 = arith.constant 1.000000e+00 : f32
    %255 = vector.broadcast %cst_100 : f32 to vector<2x64xf32>
    %256 = arith.addf %255, %254 : vector<2x64xf32>
    %257 = arith.divf %255, %256 : vector<2x64xf32>
    %258 = vector.extract_strided_slice %118 {offsets = [8, 0], sizes = [2, 64], strides = [1, 1]} : vector<20x64xf32> to vector<2x64xf32>
    %259 = arith.mulf %250, %243 : vector<2x64xf32>
    %260 = arith.addf %258, %259 : vector<2x64xf32>
    %261 = math.tanh %260 : vector<2x64xf32>
    %cst_101 = arith.constant 1.000000e+00 : f32
    %262 = vector.broadcast %cst_101 : f32 to vector<2x64xf32>
    %263 = arith.subf %262, %257 : vector<2x64xf32>
    %264 = arith.mulf %263, %261 : vector<2x64xf32>
    %265 = arith.mulf %257, %238 : vector<2x64xf32>
    %266 = arith.addf %264, %265 : vector<2x64xf32>
    %cst_102 = arith.constant dense<0.000000e+00> : vector<2x64xf32>
    %267 = tpu.matmul %266, %120, %cst_102 {dimension_numbers = #tpu.dot_dimension_numbers<[1], [0], [0], [1], [0, 0, 1, 1], [], []>} : vector<2x64xf32>, vector<64x64xf32>, vector<2x64xf32> -> vector<2x64xf32>
    %cst_103 = arith.constant dense<0.000000e+00> : vector<2x64xf32>
    %268 = tpu.matmul %266, %122, %cst_103 {dimension_numbers = #tpu.dot_dimension_numbers<[1], [0], [0], [1], [0, 0, 1, 1], [], []>} : vector<2x64xf32>, vector<64x64xf32>, vector<2x64xf32> -> vector<2x64xf32>
    %cst_104 = arith.constant dense<0.000000e+00> : vector<2x64xf32>
    %269 = tpu.matmul %266, %124, %cst_104 {dimension_numbers = #tpu.dot_dimension_numbers<[1], [0], [0], [1], [0, 0, 1, 1], [], []>} : vector<2x64xf32>, vector<64x64xf32>, vector<2x64xf32> -> vector<2x64xf32>
    %270 = vector.broadcast %125 : vector<1x64xf32> to vector<2x64xf32>
    %271 = arith.addf %269, %270 : vector<2x64xf32>
    %272 = vector.extract_strided_slice %80 {offsets = [10, 0], sizes = [2, 64], strides = [1, 1]} : vector<20x64xf32> to vector<2x64xf32>
    %273 = arith.addf %272, %267 : vector<2x64xf32>
    %274 = arith.negf %273 : vector<2x64xf32>
    %275 = math.exp %274 : vector<2x64xf32>
    %cst_105 = arith.constant 1.000000e+00 : f32
    %276 = vector.broadcast %cst_105 : f32 to vector<2x64xf32>
    %277 = arith.addf %276, %275 : vector<2x64xf32>
    %278 = arith.divf %276, %277 : vector<2x64xf32>
    %279 = vector.extract_strided_slice %99 {offsets = [10, 0], sizes = [2, 64], strides = [1, 1]} : vector<20x64xf32> to vector<2x64xf32>
    %280 = arith.addf %279, %268 : vector<2x64xf32>
    %281 = arith.negf %280 : vector<2x64xf32>
    %282 = math.exp %281 : vector<2x64xf32>
    %cst_106 = arith.constant 1.000000e+00 : f32
    %283 = vector.broadcast %cst_106 : f32 to vector<2x64xf32>
    %284 = arith.addf %283, %282 : vector<2x64xf32>
    %285 = arith.divf %283, %284 : vector<2x64xf32>
    %286 = vector.extract_strided_slice %118 {offsets = [10, 0], sizes = [2, 64], strides = [1, 1]} : vector<20x64xf32> to vector<2x64xf32>
    %287 = arith.mulf %278, %271 : vector<2x64xf32>
    %288 = arith.addf %286, %287 : vector<2x64xf32>
    %289 = math.tanh %288 : vector<2x64xf32>
    %cst_107 = arith.constant 1.000000e+00 : f32
    %290 = vector.broadcast %cst_107 : f32 to vector<2x64xf32>
    %291 = arith.subf %290, %285 : vector<2x64xf32>
    %292 = arith.mulf %291, %289 : vector<2x64xf32>
    %293 = arith.mulf %285, %266 : vector<2x64xf32>
    %294 = arith.addf %292, %293 : vector<2x64xf32>
    %cst_108 = arith.constant dense<0.000000e+00> : vector<2x64xf32>
    %295 = tpu.matmul %294, %120, %cst_108 {dimension_numbers = #tpu.dot_dimension_numbers<[1], [0], [0], [1], [0, 0, 1, 1], [], []>} : vector<2x64xf32>, vector<64x64xf32>, vector<2x64xf32> -> vector<2x64xf32>
    %cst_109 = arith.constant dense<0.000000e+00> : vector<2x64xf32>
    %296 = tpu.matmul %294, %122, %cst_109 {dimension_numbers = #tpu.dot_dimension_numbers<[1], [0], [0], [1], [0, 0, 1, 1], [], []>} : vector<2x64xf32>, vector<64x64xf32>, vector<2x64xf32> -> vector<2x64xf32>
    %cst_110 = arith.constant dense<0.000000e+00> : vector<2x64xf32>
    %297 = tpu.matmul %294, %124, %cst_110 {dimension_numbers = #tpu.dot_dimension_numbers<[1], [0], [0], [1], [0, 0, 1, 1], [], []>} : vector<2x64xf32>, vector<64x64xf32>, vector<2x64xf32> -> vector<2x64xf32>
    %298 = vector.broadcast %125 : vector<1x64xf32> to vector<2x64xf32>
    %299 = arith.addf %297, %298 : vector<2x64xf32>
    %300 = vector.extract_strided_slice %80 {offsets = [12, 0], sizes = [2, 64], strides = [1, 1]} : vector<20x64xf32> to vector<2x64xf32>
    %301 = arith.addf %300, %295 : vector<2x64xf32>
    %302 = arith.negf %301 : vector<2x64xf32>
    %303 = math.exp %302 : vector<2x64xf32>
    %cst_111 = arith.constant 1.000000e+00 : f32
    %304 = vector.broadcast %cst_111 : f32 to vector<2x64xf32>
    %305 = arith.addf %304, %303 : vector<2x64xf32>
    %306 = arith.divf %304, %305 : vector<2x64xf32>
    %307 = vector.extract_strided_slice %99 {offsets = [12, 0], sizes = [2, 64], strides = [1, 1]} : vector<20x64xf32> to vector<2x64xf32>
    %308 = arith.addf %307, %296 : vector<2x64xf32>
    %309 = arith.negf %308 : vector<2x64xf32>
    %310 = math.exp %309 : vector<2x64xf32>
    %cst_112 = arith.constant 1.000000e+00 : f32
    %311 = vector.broadcast %cst_112 : f32 to vector<2x64xf32>
    %312 = arith.addf %311, %310 : vector<2x64xf32>
    %313 = arith.divf %311, %312 : vector<2x64xf32>
    %314 = vector.extract_strided_slice %118 {offsets = [12, 0], sizes = [2, 64], strides = [1, 1]} : vector<20x64xf32> to vector<2x64xf32>
    %315 = arith.mulf %306, %299 : vector<2x64xf32>
    %316 = arith.addf %314, %315 : vector<2x64xf32>
    %317 = math.tanh %316 : vector<2x64xf32>
    %cst_113 = arith.constant 1.000000e+00 : f32
    %318 = vector.broadcast %cst_113 : f32 to vector<2x64xf32>
    %319 = arith.subf %318, %313 : vector<2x64xf32>
    %320 = arith.mulf %319, %317 : vector<2x64xf32>
    %321 = arith.mulf %313, %294 : vector<2x64xf32>
    %322 = arith.addf %320, %321 : vector<2x64xf32>
    %cst_114 = arith.constant dense<0.000000e+00> : vector<2x64xf32>
    %323 = tpu.matmul %322, %120, %cst_114 {dimension_numbers = #tpu.dot_dimension_numbers<[1], [0], [0], [1], [0, 0, 1, 1], [], []>} : vector<2x64xf32>, vector<64x64xf32>, vector<2x64xf32> -> vector<2x64xf32>
    %cst_115 = arith.constant dense<0.000000e+00> : vector<2x64xf32>
    %324 = tpu.matmul %322, %122, %cst_115 {dimension_numbers = #tpu.dot_dimension_numbers<[1], [0], [0], [1], [0, 0, 1, 1], [], []>} : vector<2x64xf32>, vector<64x64xf32>, vector<2x64xf32> -> vector<2x64xf32>
    %cst_116 = arith.constant dense<0.000000e+00> : vector<2x64xf32>
    %325 = tpu.matmul %322, %124, %cst_116 {dimension_numbers = #tpu.dot_dimension_numbers<[1], [0], [0], [1], [0, 0, 1, 1], [], []>} : vector<2x64xf32>, vector<64x64xf32>, vector<2x64xf32> -> vector<2x64xf32>
    %326 = vector.broadcast %125 : vector<1x64xf32> to vector<2x64xf32>
    %327 = arith.addf %325, %326 : vector<2x64xf32>
    %328 = vector.extract_strided_slice %80 {offsets = [14, 0], sizes = [2, 64], strides = [1, 1]} : vector<20x64xf32> to vector<2x64xf32>
    %329 = arith.addf %328, %323 : vector<2x64xf32>
    %330 = arith.negf %329 : vector<2x64xf32>
    %331 = math.exp %330 : vector<2x64xf32>
    %cst_117 = arith.constant 1.000000e+00 : f32
    %332 = vector.broadcast %cst_117 : f32 to vector<2x64xf32>
    %333 = arith.addf %332, %331 : vector<2x64xf32>
    %334 = arith.divf %332, %333 : vector<2x64xf32>
    %335 = vector.extract_strided_slice %99 {offsets = [14, 0], sizes = [2, 64], strides = [1, 1]} : vector<20x64xf32> to vector<2x64xf32>
    %336 = arith.addf %335, %324 : vector<2x64xf32>
    %337 = arith.negf %336 : vector<2x64xf32>
    %338 = math.exp %337 : vector<2x64xf32>
    %cst_118 = arith.constant 1.000000e+00 : f32
    %339 = vector.broadcast %cst_118 : f32 to vector<2x64xf32>
    %340 = arith.addf %339, %338 : vector<2x64xf32>
    %341 = arith.divf %339, %340 : vector<2x64xf32>
    %342 = vector.extract_strided_slice %118 {offsets = [14, 0], sizes = [2, 64], strides = [1, 1]} : vector<20x64xf32> to vector<2x64xf32>
    %343 = arith.mulf %334, %327 : vector<2x64xf32>
    %344 = arith.addf %342, %343 : vector<2x64xf32>
    %345 = math.tanh %344 : vector<2x64xf32>
    %cst_119 = arith.constant 1.000000e+00 : f32
    %346 = vector.broadcast %cst_119 : f32 to vector<2x64xf32>
    %347 = arith.subf %346, %341 : vector<2x64xf32>
    %348 = arith.mulf %347, %345 : vector<2x64xf32>
    %349 = arith.mulf %341, %322 : vector<2x64xf32>
    %350 = arith.addf %348, %349 : vector<2x64xf32>
    %cst_120 = arith.constant dense<0.000000e+00> : vector<2x64xf32>
    %351 = tpu.matmul %350, %120, %cst_120 {dimension_numbers = #tpu.dot_dimension_numbers<[1], [0], [0], [1], [0, 0, 1, 1], [], []>} : vector<2x64xf32>, vector<64x64xf32>, vector<2x64xf32> -> vector<2x64xf32>
    %cst_121 = arith.constant dense<0.000000e+00> : vector<2x64xf32>
    %352 = tpu.matmul %350, %122, %cst_121 {dimension_numbers = #tpu.dot_dimension_numbers<[1], [0], [0], [1], [0, 0, 1, 1], [], []>} : vector<2x64xf32>, vector<64x64xf32>, vector<2x64xf32> -> vector<2x64xf32>
    %cst_122 = arith.constant dense<0.000000e+00> : vector<2x64xf32>
    %353 = tpu.matmul %350, %124, %cst_122 {dimension_numbers = #tpu.dot_dimension_numbers<[1], [0], [0], [1], [0, 0, 1, 1], [], []>} : vector<2x64xf32>, vector<64x64xf32>, vector<2x64xf32> -> vector<2x64xf32>
    %354 = vector.broadcast %125 : vector<1x64xf32> to vector<2x64xf32>
    %355 = arith.addf %353, %354 : vector<2x64xf32>
    %356 = vector.extract_strided_slice %80 {offsets = [16, 0], sizes = [2, 64], strides = [1, 1]} : vector<20x64xf32> to vector<2x64xf32>
    %357 = arith.addf %356, %351 : vector<2x64xf32>
    %358 = arith.negf %357 : vector<2x64xf32>
    %359 = math.exp %358 : vector<2x64xf32>
    %cst_123 = arith.constant 1.000000e+00 : f32
    %360 = vector.broadcast %cst_123 : f32 to vector<2x64xf32>
    %361 = arith.addf %360, %359 : vector<2x64xf32>
    %362 = arith.divf %360, %361 : vector<2x64xf32>
    %363 = vector.extract_strided_slice %99 {offsets = [16, 0], sizes = [2, 64], strides = [1, 1]} : vector<20x64xf32> to vector<2x64xf32>
    %364 = arith.addf %363, %352 : vector<2x64xf32>
    %365 = arith.negf %364 : vector<2x64xf32>
    %366 = math.exp %365 : vector<2x64xf32>
    %cst_124 = arith.constant 1.000000e+00 : f32
    %367 = vector.broadcast %cst_124 : f32 to vector<2x64xf32>
    %368 = arith.addf %367, %366 : vector<2x64xf32>
    %369 = arith.divf %367, %368 : vector<2x64xf32>
    %370 = vector.extract_strided_slice %118 {offsets = [16, 0], sizes = [2, 64], strides = [1, 1]} : vector<20x64xf32> to vector<2x64xf32>
    %371 = arith.mulf %362, %355 : vector<2x64xf32>
    %372 = arith.addf %370, %371 : vector<2x64xf32>
    %373 = math.tanh %372 : vector<2x64xf32>
    %cst_125 = arith.constant 1.000000e+00 : f32
    %374 = vector.broadcast %cst_125 : f32 to vector<2x64xf32>
    %375 = arith.subf %374, %369 : vector<2x64xf32>
    %376 = arith.mulf %375, %373 : vector<2x64xf32>
    %377 = arith.mulf %369, %350 : vector<2x64xf32>
    %378 = arith.addf %376, %377 : vector<2x64xf32>
    %cst_126 = arith.constant dense<0.000000e+00> : vector<2x64xf32>
    %379 = tpu.matmul %378, %120, %cst_126 {dimension_numbers = #tpu.dot_dimension_numbers<[1], [0], [0], [1], [0, 0, 1, 1], [], []>} : vector<2x64xf32>, vector<64x64xf32>, vector<2x64xf32> -> vector<2x64xf32>
    %cst_127 = arith.constant dense<0.000000e+00> : vector<2x64xf32>
    %380 = tpu.matmul %378, %122, %cst_127 {dimension_numbers = #tpu.dot_dimension_numbers<[1], [0], [0], [1], [0, 0, 1, 1], [], []>} : vector<2x64xf32>, vector<64x64xf32>, vector<2x64xf32> -> vector<2x64xf32>
    %cst_128 = arith.constant dense<0.000000e+00> : vector<2x64xf32>
    %381 = tpu.matmul %378, %124, %cst_128 {dimension_numbers = #tpu.dot_dimension_numbers<[1], [0], [0], [1], [0, 0, 1, 1], [], []>} : vector<2x64xf32>, vector<64x64xf32>, vector<2x64xf32> -> vector<2x64xf32>
    %382 = vector.broadcast %125 : vector<1x64xf32> to vector<2x64xf32>
    %383 = arith.addf %381, %382 : vector<2x64xf32>
    %384 = vector.extract_strided_slice %80 {offsets = [18, 0], sizes = [2, 64], strides = [1, 1]} : vector<20x64xf32> to vector<2x64xf32>
    %385 = arith.addf %384, %379 : vector<2x64xf32>
    %386 = arith.negf %385 : vector<2x64xf32>
    %387 = math.exp %386 : vector<2x64xf32>
    %cst_129 = arith.constant 1.000000e+00 : f32
    %388 = vector.broadcast %cst_129 : f32 to vector<2x64xf32>
    %389 = arith.addf %388, %387 : vector<2x64xf32>
    %390 = arith.divf %388, %389 : vector<2x64xf32>
    %391 = vector.extract_strided_slice %99 {offsets = [18, 0], sizes = [2, 64], strides = [1, 1]} : vector<20x64xf32> to vector<2x64xf32>
    %392 = arith.addf %391, %380 : vector<2x64xf32>
    %393 = arith.negf %392 : vector<2x64xf32>
    %394 = math.exp %393 : vector<2x64xf32>
    %cst_130 = arith.constant 1.000000e+00 : f32
    %395 = vector.broadcast %cst_130 : f32 to vector<2x64xf32>
    %396 = arith.addf %395, %394 : vector<2x64xf32>
    %397 = arith.divf %395, %396 : vector<2x64xf32>
    %398 = vector.extract_strided_slice %118 {offsets = [18, 0], sizes = [2, 64], strides = [1, 1]} : vector<20x64xf32> to vector<2x64xf32>
    %399 = arith.mulf %390, %383 : vector<2x64xf32>
    %400 = arith.addf %398, %399 : vector<2x64xf32>
    %401 = math.tanh %400 : vector<2x64xf32>
    %cst_131 = arith.constant 1.000000e+00 : f32
    %402 = vector.broadcast %cst_131 : f32 to vector<2x64xf32>
    %403 = arith.subf %402, %397 : vector<2x64xf32>
    %404 = arith.mulf %403, %401 : vector<2x64xf32>
    %405 = arith.mulf %397, %378 : vector<2x64xf32>
    %406 = arith.addf %404, %405 : vector<2x64xf32>
    %c0_132 = arith.constant 0 : index
    %c0_133 = arith.constant 0 : index
    %407 = vector.load %arg7[%c0_132, %c0_133] : memref<64x10xf32, #tpu.memory_space<vmem>>, vector<64x10xf32>
    %cst_134 = arith.constant dense<0.000000e+00> : vector<2x10xf32>
    %408 = tpu.matmul %406, %407, %cst_134 {dimension_numbers = #tpu.dot_dimension_numbers<[1], [0], [0], [1], [0, 0, 1, 1], [], []>} : vector<2x64xf32>, vector<64x10xf32>, vector<2x10xf32> -> vector<2x10xf32>
    %c0_135 = arith.constant 0 : index
    %c0_136 = arith.constant 0 : index
    %409 = vector.load %arg8[%c0_135, %c0_136] : memref<64x10xf32, #tpu.memory_space<vmem>>, vector<64x10xf32>
    %cst_137 = arith.constant dense<0.000000e+00> : vector<2x10xf32>
    %410 = tpu.matmul %154, %409, %cst_137 {dimension_numbers = #tpu.dot_dimension_numbers<[1], [0], [0], [1], [0, 0, 1, 1], [], []>} : vector<2x64xf32>, vector<64x10xf32>, vector<2x10xf32> -> vector<2x10xf32>
    %411 = arith.addf %408, %410 : vector<2x10xf32>
    %c0_138 = arith.constant 0 : index
    %c0_139 = arith.constant 0 : index
    %412 = vector.load %arg9[%c0_138, %c0_139] : memref<1x10xf32, #tpu.memory_space<vmem>>, vector<1x10xf32>
    %413 = vector.broadcast %412 : vector<1x10xf32> to vector<2x10xf32>
    %414 = arith.addf %411, %413 : vector<2x10xf32>
    %c0_140 = arith.constant 0 : index
    %c0_141 = arith.constant 0 : index
    %415 = vector.load %arg10[%c0_140, %c0_141] : memref<2x10xf32, #tpu.memory_space<vmem>>, vector<2x10xf32>
    tpu.vector_store %arg10[%c0_140, %c0_141], %414 {strides = array<i32>} : memref<2x10xf32, #tpu.memory_space<vmem>>, vector<2x10xf32>,
    return
  }
}

</mosaic_0001>

<llo_original>
// kernel: a_call__.1
$region0: #{a_call__.1}
  #allocation0 [shape = 'u32[]', space=smem, size = 0x4, offset = 0x4, fixed_abs, tag = 'smem constant byte address 0x4 - core index']
  #allocation1 [shape = 'u32[72,128]{1,0:T(1,128)}', space=vmem, size = 0x9000, scoped, tag = 'internal scratch']
  %s0 = inlined_call_operand.vmem [shape: f32[2,4,100,36], index: 0, kind: input, shape index: {}]
  %s1 = inlined_call_operand.vmem [shape: f32[10,100], index: 1, kind: input, shape index: {}]
  %s2 = inlined_call_operand.vmem [shape: f32[10,1], index: 2, kind: input, shape index: {}]
  %s3 = inlined_call_operand.vmem [shape: f32[3,36,64], index: 3, kind: input, shape index: {}]
  %s4 = inlined_call_operand.vmem [shape: f32[3,64,64], index: 4, kind: input, shape index: {}]
  %s5 = inlined_call_operand.vmem [shape: f32[3,1,64], index: 5, kind: input, shape index: {}]
  %s6 = inlined_call_operand.vmem [shape: f32[1,64], index: 6, kind: input, shape index: {}]
  %s7 = inlined_call_operand.vmem [shape: f32[64,10], index: 7, kind: input, shape index: {}]
  %s8 = inlined_call_operand.vmem [shape: f32[64,10], index: 8, kind: input, shape index: {}]
  %s9 = inlined_call_operand.vmem [shape: f32[1,10], index: 9, kind: input, shape index: {}]
  %s10 = inlined_call_operand.hbm [shape: f32[2,10], index: 10, kind: output, shape index: {}]
  %s11 = sld [smem:[#allocation0]]
  $region50: #{a_call__.1} parent=0
    _
  %s13 = ssub.s32 1, %s11
  %s14 = scalar_select 0, %s13, %s11
  $region1: #{a_call__.1} parent=0
    #allocation2 [shape = 'u8[1024]{0}', space=vmem, size = 0x400, scoped, tag = 'output window, operand 0, single buffered']
    #allocation3 [shape = 's32[1]{0}', space=sflag, size = 0x4, scoped, tag = 'scoped memory for a_call__.1']
    %15 = vsyncpa [#allocation3], 0
    // Predicated region
    $region2: #{a_call__.1} parent=1 // pred_check
      _
    $region3: #{a_call__.1} parent=1 // pred_check_branch
      %17 = sbr.rel (0) target = $region5
    $region4: #{a_call__.1} parent=1 // pred_region
      _
    $region5: #{a_call__.1} parent=1 // pred_fallthru
      _
    // Predicated region
    $region6: #{a_call__.1} parent=1 // pred_check
      _
    $region7: #{a_call__.1} parent=1 // pred_check_branch
      %19 = sbr.rel (0) target = $region9
    $region8: #{a_call__.1} parent=1 // pred_region
      _
    $region9: #{a_call__.1} parent=1 // pred_fallthru
      _
    // Predicated region
    $region10: #{a_call__.1} parent=1 // pred_check
      _
    $region11: #{a_call__.1} parent=1 // pred_check_branch
      %21 = sbr.rel (0) target = $region13
    $region12: #{a_call__.1} parent=1 // pred_region
      _
    $region13: #{a_call__.1} parent=1 // pred_fallthru
      _
    // Predicated region
    $region14: #{a_call__.1} parent=1 // pred_check
      _
    $region15: #{a_call__.1} parent=1 // pred_check_branch
      %23 = sbr.rel (0) target = $region17
    $region16: #{a_call__.1} parent=1 // pred_region
      _
    $region17: #{a_call__.1} parent=1 // pred_fallthru
      _
    // Predicated region
    $region18: #{a_call__.1} parent=1 // pred_check
      _
    $region19: #{a_call__.1} parent=1 // pred_check_branch
      %25 = sbr.rel (0) target = $region21
    $region20: #{a_call__.1} parent=1 // pred_region
      _
    $region21: #{a_call__.1} parent=1 // pred_fallthru
      _
    // Predicated region
    $region22: #{a_call__.1} parent=1 // pred_check
      _
    $region23: #{a_call__.1} parent=1 // pred_check_branch
      %27 = sbr.rel (0) target = $region25
    $region24: #{a_call__.1} parent=1 // pred_region
      _
    $region25: #{a_call__.1} parent=1 // pred_fallthru
      _
    // Predicated region
    $region26: #{a_call__.1} parent=1 // pred_check
      _
    $region27: #{a_call__.1} parent=1 // pred_check_branch
      %29 = sbr.rel (0) target = $region29
    $region28: #{a_call__.1} parent=1 // pred_region
      _
    $region29: #{a_call__.1} parent=1 // pred_fallthru
      _
    // Predicated region
    $region30: #{a_call__.1} parent=1 // pred_check
      _
    $region31: #{a_call__.1} parent=1 // pred_check_branch
      %31 = sbr.rel (0) target = $region33
    $region32: #{a_call__.1} parent=1 // pred_region
      _
    $region33: #{a_call__.1} parent=1 // pred_fallthru
      _
    // Predicated region
    $region34: #{a_call__.1} parent=1 // pred_check
      _
    $region35: #{a_call__.1} parent=1 // pred_check_branch
      %33 = sbr.rel (0) target = $region37
    $region36: #{a_call__.1} parent=1 // pred_region
      _
    $region37: #{a_call__.1} parent=1 // pred_fallthru
      _
    // Predicated region
    $region38: #{a_call__.1} parent=1 // pred_check
      _
    $region39: #{a_call__.1} parent=1 // pred_check_branch
      %35 = sbr.rel (0) target = $region41
    $region40: #{a_call__.1} parent=1 // pred_region
      _
    $region41: #{a_call__.1} parent=1 // pred_fallthru
      _
    %v36 = vld [vmem:[%s1] sm:$0xff]
    %v37 = vld [vmem:[%s1 + $0x8] sm:$0x3]
    %v38 = vld [vmem:[%s2] sm:$0xff]
    %v39 = vld [vmem:[%s2 + $0x8] sm:$0x3]
    %v40 = vld [vmem:[%s0] sm:$0xff]
    %v41 = vld [vmem:[%s0 + $0x8] sm:$0xff]
    %v42 = vld [vmem:[%s0 + $0x10] sm:$0xff]
    %v43 = vld [vmem:[%s0 + $0x18] sm:$0xff]
    %v44 = vld [vmem:[%s0 + $0x20] sm:$0xff]
    %v45 = vld [vmem:[%s0 + $0x28] sm:$0xff]
    %v46 = vld [vmem:[%s0 + $0x30] sm:$0xff]
    %v47 = vld [vmem:[%s0 + $0x38] sm:$0xff]
    %v48 = vld [vmem:[%s0 + $0x40] sm:$0xff]
    %v49 = vld [vmem:[%s0 + $0x48] sm:$0xff]
    %v50 = vld [vmem:[%s0 + $0x50] sm:$0xff]
    %v51 = vld [vmem:[%s0 + $0x58] sm:$0xff]
    %v52 = vld [vmem:[%s0 + $0x60] sm:$0xf]
    %vm53 = vcmask 818176
    %v55 = vsel %vm53, %v36, 0
    %v58 = vsel %vm53, %v37, 0
    %vm60 = vcmask 1043456
    %v62 = vsel %vm60, %v52, 0
    %64 = vmatpush.msra.mxu0 0.0
    %65 = vmatpush.msra.mxu0 0.0
    %66 = vmatpush.msra.mxu0 0.0
    %67 = vmatpush.msra.mxu0 %v62
    %68 = vmatpush.msra.mxu0 %v51
    %69 = vmatpush.msra.mxu0 %v50
    %70 = vmatpush.msra.mxu0 %v49
    %71 = vmatpush.msra.mxu0 %v48
    %72 = vmatpush.msra.mxu0 %v47
    %73 = vmatpush.msra.mxu0 %v46
    %74 = vmatpush.msra.mxu0 %v45
    %75 = vmatpush.msra.mxu0 %v44
    %76 = vmatpush.msra.mxu0 %v43
    %77 = vmatpush.msra.mxu0 %v42
    %78 = vmatpush.msra.mxu0 %v41
    %79 = vmatpush.msra.mxu0 %v40
    %80 = vmatmul.f32.gmra.mxu0 %v55
    %v81 = vpop.f32.mrf.mxu0
    %v82 = vadd.f32 0.0, %v81
    %83 = vmatmul.f32.gmra.mxu0 %v58
    %v84 = vpop.f32.mrf.mxu0
    %v85 = vadd.f32 0.0, %v84
    %86 = vdwg.mxu0
    %s87 = scalar_lea.vmem %s0, 104
    %v88 = vld [vmem:[%s87] sm:$0xff]
    %v89 = vld [vmem:[%s87 + $0x8] sm:$0xff]
    %v90 = vld [vmem:[%s87 + $0x10] sm:$0xff]
    %v91 = vld [vmem:[%s87 + $0x18] sm:$0xff]
    %v92 = vld [vmem:[%s87 + $0x20] sm:$0xff]
    %v93 = vld [vmem:[%s87 + $0x28] sm:$0xff]
    %v94 = vld [vmem:[%s87 + $0x30] sm:$0xff]
    %v95 = vld [vmem:[%s87 + $0x38] sm:$0xff]
    %v96 = vld [vmem:[%s87 + $0x40] sm:$0xff]
    %v97 = vld [vmem:[%s87 + $0x48] sm:$0xff]
    %v98 = vld [vmem:[%s87 + $0x50] sm:$0xff]
    %v99 = vld [vmem:[%s87 + $0x58] sm:$0xff]
    %v100 = vld [vmem:[%s87 + $0x60] sm:$0xf]
    %v102 = vsel %vm60, %v100, 0
    %104 = vmatpush.msra.mxu0 0.0
    %105 = vmatpush.msra.mxu0 0.0
    %106 = vmatpush.msra.mxu0 0.0
    %107 = vmatpush.msra.mxu0 %v102
    %108 = vmatpush.msra.mxu0 %v99
    %109 = vmatpush.msra.mxu0 %v98
    %110 = vmatpush.msra.mxu0 %v97
    %111 = vmatpush.msra.mxu0 %v96
    %112 = vmatpush.msra.mxu0 %v95
    %113 = vmatpush.msra.mxu0 %v94
    %114 = vmatpush.msra.mxu0 %v93
    %115 = vmatpush.msra.mxu0 %v92
    %116 = vmatpush.msra.mxu0 %v91
    %117 = vmatpush.msra.mxu0 %v90
    %118 = vmatpush.msra.mxu0 %v89
    %119 = vmatpush.msra.mxu0 %v88
    %120 = vmatmul.f32.gmra.mxu0 %v55
    %v121 = vpop.f32.mrf.mxu0
    %v122 = vadd.f32 0.0, %v121
    %123 = vmatmul.f32.gmra.mxu0 %v58
    %v124 = vpop.f32.mrf.mxu0
    %v125 = vadd.f32 0.0, %v124
    %126 = vdwg.mxu0
    %v127 = vmax.f32 %v82, %v122
    %v128 = vmax.f32 %v85, %v125
    %s129 = scalar_lea.vmem %s0, 208
    %v130 = vld [vmem:[%s129] sm:$0xff]
    %v131 = vld [vmem:[%s129 + $0x8] sm:$0xff]
    %v132 = vld [vmem:[%s129 + $0x10] sm:$0xff]
    %v133 = vld [vmem:[%s129 + $0x18] sm:$0xff]
    %v134 = vld [vmem:[%s129 + $0x20] sm:$0xff]
    %v135 = vld [vmem:[%s129 + $0x28] sm:$0xff]
    %v136 = vld [vmem:[%s129 + $0x30] sm:$0xff]
    %v137 = vld [vmem:[%s129 + $0x38] sm:$0xff]
    %v138 = vld [vmem:[%s129 + $0x40] sm:$0xff]
    %v139 = vld [vmem:[%s129 + $0x48] sm:$0xff]
    %v140 = vld [vmem:[%s129 + $0x50] sm:$0xff]
    %v141 = vld [vmem:[%s129 + $0x58] sm:$0xff]
    %v142 = vld [vmem:[%s129 + $0x60] sm:$0xf]
    %v144 = vsel %vm60, %v142, 0
    %146 = vmatpush.msra.mxu0 0.0
    %147 = vmatpush.msra.mxu0 0.0
    %148 = vmatpush.msra.mxu0 0.0
    %149 = vmatpush.msra.mxu0 %v144
    %150 = vmatpush.msra.mxu0 %v141
    %151 = vmatpush.msra.mxu0 %v140
    %152 = vmatpush.msra.mxu0 %v139
    %153 = vmatpush.msra.mxu0 %v138
    %154 = vmatpush.msra.mxu0 %v137
    %155 = vmatpush.msra.mxu0 %v136
    %156 = vmatpush.msra.mxu0 %v135
    %157 = vmatpush.msra.mxu0 %v134
    %158 = vmatpush.msra.mxu0 %v133
    %159 = vmatpush.msra.mxu0 %v132
    %160 = vmatpush.msra.mxu0 %v131
    %161 = vmatpush.msra.mxu0 %v130
    %162 = vmatmul.f32.gmra.mxu0 %v55
    %v163 = vpop.f32.mrf.mxu0
    %v164 = vadd.f32 0.0, %v163
    %165 = vmatmul.f32.gmra.mxu0 %v58
    %v166 = vpop.f32.mrf.mxu0
    %v167 = vadd.f32 0.0, %v166
    %168 = vdwg.mxu0
    %v169 = vmax.f32 %v127, %v164
    %v170 = vmax.f32 %v128, %v167
    %s171 = scalar_lea.vmem %s0, 312
    %v172 = vld [vmem:[%s171] sm:$0xff]
    %v173 = vld [vmem:[%s171 + $0x8] sm:$0xff]
    %v174 = vld [vmem:[%s171 + $0x10] sm:$0xff]
    %v175 = vld [vmem:[%s171 + $0x18] sm:$0xff]
    %v176 = vld [vmem:[%s171 + $0x20] sm:$0xff]
    %v177 = vld [vmem:[%s171 + $0x28] sm:$0xff]
    %v178 = vld [vmem:[%s171 + $0x30] sm:$0xff]
    %v179 = vld [vmem:[%s171 + $0x38] sm:$0xff]
    %v180 = vld [vmem:[%s171 + $0x40] sm:$0xff]
    %v181 = vld [vmem:[%s171 + $0x48] sm:$0xff]
    %v182 = vld [vmem:[%s171 + $0x50] sm:$0xff]
    %v183 = vld [vmem:[%s171 + $0x58] sm:$0xff]
    %v184 = vld [vmem:[%s171 + $0x60] sm:$0xf]
    %v186 = vsel %vm60, %v184, 0
    %188 = vmatpush.msra.mxu0 0.0
    %189 = vmatpush.msra.mxu0 0.0
    %190 = vmatpush.msra.mxu0 0.0
    %191 = vmatpush.msra.mxu0 %v186
    %192 = vmatpush.msra.mxu0 %v183
    %193 = vmatpush.msra.mxu0 %v182
    %194 = vmatpush.msra.mxu0 %v181
    %195 = vmatpush.msra.mxu0 %v180
    %196 = vmatpush.msra.mxu0 %v179
    %197 = vmatpush.msra.mxu0 %v178
    %198 = vmatpush.msra.mxu0 %v177
    %199 = vmatpush.msra.mxu0 %v176
    %200 = vmatpush.msra.mxu0 %v175
    %201 = vmatpush.msra.mxu0 %v174
    %202 = vmatpush.msra.mxu0 %v173
    %203 = vmatpush.msra.mxu0 %v172
    %204 = vmatmul.f32.gmra.mxu0 %v55
    %v205 = vpop.f32.mrf.mxu0
    %v206 = vadd.f32 0.0, %v205
    %207 = vmatmul.f32.gmra.mxu0 %v58
    %v208 = vpop.f32.mrf.mxu0
    %v209 = vadd.f32 0.0, %v208
    %210 = vdwg.mxu0
    %v211 = vmax.f32 %v169, %v206
    %v212 = vmax.f32 %v170, %v209
    %214 = vset.pattern.permute.xlu0 0
    %215 = vperm.xlu0 %214, %v38
    %v216 = vpop.permute.xlu0 %215
    %219 = vset.pattern.permute.xlu0 0
    %220 = vperm.xlu0 %219, %v39
    %v221 = vpop.permute.xlu0 %220
    %v223 = vadd.f32 %v211, %v216
    %v224 = vadd.f32 %v212, %v221
    %s225 = scalar_lea.vmem %s0, 416
    %v226 = vld [vmem:[%s225] sm:$0xff]
    %v227 = vld [vmem:[%s225 + $0x8] sm:$0xff]
    %v228 = vld [vmem:[%s225 + $0x10] sm:$0xff]
    %v229 = vld [vmem:[%s225 + $0x18] sm:$0xff]
    %v230 = vld [vmem:[%s225 + $0x20] sm:$0xff]
    %v231 = vld [vmem:[%s225 + $0x28] sm:$0xff]
    %v232 = vld [vmem:[%s225 + $0x30] sm:$0xff]
    %v233 = vld [vmem:[%s225 + $0x38] sm:$0xff]
    %v234 = vld [vmem:[%s225 + $0x40] sm:$0xff]
    %v235 = vld [vmem:[%s225 + $0x48] sm:$0xff]
    %v236 = vld [vmem:[%s225 + $0x50] sm:$0xff]
    %v237 = vld [vmem:[%s225 + $0x58] sm:$0xff]
    %v238 = vld [vmem:[%s225 + $0x60] sm:$0xf]
    %v240 = vsel %vm60, %v238, 0
    %242 = vmatpush.msra.mxu0 0.0
    %243 = vmatpush.msra.mxu0 0.0
    %244 = vmatpush.msra.mxu0 0.0
    %245 = vmatpush.msra.mxu0 %v240
    %246 = vmatpush.msra.mxu0 %v237
    %247 = vmatpush.msra.mxu0 %v236
    %248 = vmatpush.msra.mxu0 %v235
    %249 = vmatpush.msra.mxu0 %v234
    %250 = vmatpush.msra.mxu0 %v233
    %251 = vmatpush.msra.mxu0 %v232
    %252 = vmatpush.msra.mxu0 %v231
    %253 = vmatpush.msra.mxu0 %v230
    %254 = vmatpush.msra.mxu0 %v229
    %255 = vmatpush.msra.mxu0 %v228
    %256 = vmatpush.msra.mxu0 %v227
    %257 = vmatpush.msra.mxu0 %v226
    %258 = vmatmul.f32.gmra.mxu0 %v55
    %v259 = vpop.f32.mrf.mxu0
    %v260 = vadd.f32 0.0, %v259
    %261 = vmatmul.f32.gmra.mxu0 %v58
    %v262 = vpop.f32.mrf.mxu0
    %v263 = vadd.f32 0.0, %v262
    %264 = vdwg.mxu0
    %s265 = scalar_lea.vmem %s0, 520
    %v266 = vld [vmem:[%s265] sm:$0xff]
    %v267 = vld [vmem:[%s265 + $0x8] sm:$0xff]
    %v268 = vld [vmem:[%s265 + $0x10] sm:$0xff]
    %v269 = vld [vmem:[%s265 + $0x18] sm:$0xff]
    %v270 = vld [vmem:[%s265 + $0x20] sm:$0xff]
    %v271 = vld [vmem:[%s265 + $0x28] sm:$0xff]
    %v272 = vld [vmem:[%s265 + $0x30] sm:$0xff]
    %v273 = vld [vmem:[%s265 + $0x38] sm:$0xff]
    %v274 = vld [vmem:[%s265 + $0x40] sm:$0xff]
    %v275 = vld [vmem:[%s265 + $0x48] sm:$0xff]
    %v276 = vld [vmem:[%s265 + $0x50] sm:$0xff]
    %v277 = vld [vmem:[%s265 + $0x58] sm:$0xff]
    %v278 = vld [vmem:[%s265 + $0x60] sm:$0xf]
    %v280 = vsel %vm60, %v278, 0
    %282 = vmatpush.msra.mxu0 0.0
    %283 = vmatpush.msra.mxu0 0.0
    %284 = vmatpush.msra.mxu0 0.0
    %285 = vmatpush.msra.mxu0 %v280
    %286 = vmatpush.msra.mxu0 %v277
    %287 = vmatpush.msra.mxu0 %v276
    %288 = vmatpush.msra.mxu0 %v275
    %289 = vmatpush.msra.mxu0 %v274
    %290 = vmatpush.msra.mxu0 %v273
    %291 = vmatpush.msra.mxu0 %v272
    %292 = vmatpush.msra.mxu0 %v271
    %293 = vmatpush.msra.mxu0 %v270
    %294 = vmatpush.msra.mxu0 %v269
    %295 = vmatpush.msra.mxu0 %v268
    %296 = vmatpush.msra.mxu0 %v267
    %297 = vmatpush.msra.mxu0 %v266
    %298 = vmatmul.f32.gmra.mxu0 %v55
    %v299 = vpop.f32.mrf.mxu0
    %v300 = vadd.f32 0.0, %v299
    %301 = vmatmul.f32.gmra.mxu0 %v58
    %v302 = vpop.f32.mrf.mxu0
    %v303 = vadd.f32 0.0, %v302
    %304 = vdwg.mxu0
    %v305 = vmax.f32 %v260, %v300
    %v306 = vmax.f32 %v263, %v303
    %s307 = scalar_lea.vmem %s0, 624
    %v308 = vld [vmem:[%s307] sm:$0xff]
    %v309 = vld [vmem:[%s307 + $0x8] sm:$0xff]
    %v310 = vld [vmem:[%s307 + $0x10] sm:$0xff]
    %v311 = vld [vmem:[%s307 + $0x18] sm:$0xff]
    %v312 = vld [vmem:[%s307 + $0x20] sm:$0xff]
    %v313 = vld [vmem:[%s307 + $0x28] sm:$0xff]
    %v314 = vld [vmem:[%s307 + $0x30] sm:$0xff]
    %v315 = vld [vmem:[%s307 + $0x38] sm:$0xff]
    %v316 = vld [vmem:[%s307 + $0x40] sm:$0xff]
    %v317 = vld [vmem:[%s307 + $0x48] sm:$0xff]
    %v318 = vld [vmem:[%s307 + $0x50] sm:$0xff]
    %v319 = vld [vmem:[%s307 + $0x58] sm:$0xff]
    %v320 = vld [vmem:[%s307 + $0x60] sm:$0xf]
    %v322 = vsel %vm60, %v320, 0
    %324 = vmatpush.msra.mxu0 0.0
    %325 = vmatpush.msra.mxu0 0.0
    %326 = vmatpush.msra.mxu0 0.0
    %327 = vmatpush.msra.mxu0 %v322
    %328 = vmatpush.msra.mxu0 %v319
    %329 = vmatpush.msra.mxu0 %v318
    %330 = vmatpush.msra.mxu0 %v317
    %331 = vmatpush.msra.mxu0 %v316
    %332 = vmatpush.msra.mxu0 %v315
    %333 = vmatpush.msra.mxu0 %v314
    %334 = vmatpush.msra.mxu0 %v313
    %335 = vmatpush.msra.mxu0 %v312
    %336 = vmatpush.msra.mxu0 %v311
    %337 = vmatpush.msra.mxu0 %v310
    %338 = vmatpush.msra.mxu0 %v309
    %339 = vmatpush.msra.mxu0 %v308
    %340 = vmatmul.f32.gmra.mxu0 %v55
    %v341 = vpop.f32.mrf.mxu0
    %v342 = vadd.f32 0.0, %v341
    %343 = vmatmul.f32.gmra.mxu0 %v58
    %v344 = vpop.f32.mrf.mxu0
    %v345 = vadd.f32 0.0, %v344
    %346 = vdwg.mxu0
    %v347 = vmax.f32 %v305, %v342
    %v348 = vmax.f32 %v306, %v345
    %s349 = scalar_lea.vmem %s0, 728
    %v350 = vld [vmem:[%s349] sm:$0xff]
    %v351 = vld [vmem:[%s349 + $0x8] sm:$0xff]
    %v352 = vld [vmem:[%s349 + $0x10] sm:$0xff]
    %v353 = vld [vmem:[%s349 + $0x18] sm:$0xff]
    %v354 = vld [vmem:[%s349 + $0x20] sm:$0xff]
    %v355 = vld [vmem:[%s349 + $0x28] sm:$0xff]
    %v356 = vld [vmem:[%s349 + $0x30] sm:$0xff]
    %v357 = vld [vmem:[%s349 + $0x38] sm:$0xff]
    %v358 = vld [vmem:[%s349 + $0x40] sm:$0xff]
    %v359 = vld [vmem:[%s349 + $0x48] sm:$0xff]
    %v360 = vld [vmem:[%s349 + $0x50] sm:$0xff]
    %v361 = vld [vmem:[%s349 + $0x58] sm:$0xff]
    %v362 = vld [vmem:[%s349 + $0x60] sm:$0xf]
    %v364 = vsel %vm60, %v362, 0
    %366 = vmatpush.msra.mxu0 0.0
    %367 = vmatpush.msra.mxu0 0.0
    %368 = vmatpush.msra.mxu0 0.0
    %369 = vmatpush.msra.mxu0 %v364
    %370 = vmatpush.msra.mxu0 %v361
    %371 = vmatpush.msra.mxu0 %v360
    %372 = vmatpush.msra.mxu0 %v359
    %373 = vmatpush.msra.mxu0 %v358
    %374 = vmatpush.msra.mxu0 %v357
    %375 = vmatpush.msra.mxu0 %v356
    %376 = vmatpush.msra.mxu0 %v355
    %377 = vmatpush.msra.mxu0 %v354
    %378 = vmatpush.msra.mxu0 %v353
    %379 = vmatpush.msra.mxu0 %v352
    %380 = vmatpush.msra.mxu0 %v351
    %381 = vmatpush.msra.mxu0 %v350
    %382 = vmatmul.f32.gmra.mxu0 %v55
    %v383 = vpop.f32.mrf.mxu0
    %v384 = vadd.f32 0.0, %v383
    %385 = vmatmul.f32.gmra.mxu0 %v58
    %v386 = vpop.f32.mrf.mxu0
    %v387 = vadd.f32 0.0, %v386
    %388 = vdwg.mxu0
    %v389 = vmax.f32 %v347, %v384
    %v390 = vmax.f32 %v348, %v387
    %v391 = vadd.f32 %v389, %v216
    %v392 = vadd.f32 %v390, %v221
    %v394 = vrot.slane %v391, 7
    %v397 = vrot.slane %v223, 7
    %v399 = vrot.slane %v391, 6
    %v401 = vrot.slane %v223, 6
    %v403 = vrot.slane %v391, 5
    %v405 = vrot.slane %v223, 5
    %v407 = vrot.slane %v391, 4
    %v409 = vrot.slane %v223, 4
    %v411 = vrot.slane %v391, 3
    %v413 = vrot.slane %v223, 3
    %v415 = vrot.slane %v391, 2
    %v417 = vrot.slane %v223, 2
    %v419 = vrot.slane %v391, 1
    %v421 = vrot.slane %v223, 1
    %vm423 = vcmask 1040384
    %v424 = vsel %vm423, %v223, %v394
    %vm425 = vcmask 1041408
    %v426 = vsel %vm425, %v424, %v397
    %vm427 = vcmask 1042432
    %v428 = vsel %vm427, %v426, %v399
    %v429 = vsel %vm60, %v428, %v401
    %vm430 = vcmask 1044480
    %v431 = vsel %vm430, %v429, %v403
    %vm432 = vcmask 1045504
    %v433 = vsel %vm432, %v431, %v405
    %vm434 = vcmask 1046528
    %v435 = vsel %vm434, %v433, %v407
    %v436 = vsel %vm423, %v409, %v411
    %v437 = vsel %vm425, %v436, %v413
    %v438 = vsel %vm427, %v437, %v415
    %v439 = vsel %vm60, %v438, %v417
    %v440 = vsel %vm430, %v439, %v419
    %v441 = vsel %vm432, %v440, %v421
    %v442 = vsel %vm434, %v441, %v391
    %v444 = vrot.slane %v392, 7
    %v447 = vrot.slane %v224, 7
    %v449 = vrot.slane %v392, 6
    %v451 = vsel %vm423, %v224, %v444
    %v452 = vsel %vm425, %v451, %v447
    %v453 = vsel %vm427, %v452, %v449
    %v454 = vlaneseq
    %v455 = vand.u32 %v454, 127
    %vm456 = vcmp.lt.s32.totalorder %v455, 32
    %v457 = vld [vmem:[%s3] sm:$0xff]
    %v458 = vld [vmem:[%s3 + $0x8] sm:$0xff]
    %v459 = vld [vmem:[%s3 + $0x10] sm:$0xff]
    %v460 = vld [vmem:[%s3 + $0x18] sm:$0xff]
    %v461 = vld [vmem:[%s3 + $0x20] sm:$0xf]
    %vm462 = vcmask 293888
    %v464 = vsel %vm462, %v435, 0
    %v467 = vsel %vm462, %v442, 0
    %v470 = vsel %vm462, %v453, 0
    %v473 = vsel %vm60, %v461, 0
    %475 = vmatpush.msra.mxu0 0.0
    %476 = vmatpush.msra.mxu0 0.0
    %477 = vmatpush.msra.mxu0 0.0
    %478 = vmatpush.msra.mxu0 0.0
    %479 = vmatpush.msra.mxu0 0.0
    %480 = vmatpush.msra.mxu0 0.0
    %481 = vmatpush.msra.mxu0 0.0
    %482 = vmatpush.msra.mxu0 0.0
    %483 = vmatpush.msra.mxu0 0.0
    %484 = vmatpush.msra.mxu0 0.0
    %485 = vmatpush.msra.mxu0 0.0
    %486 = vmatpush.msra.mxu0 %v473
    %487 = vmatpush.msra.mxu0 %v460
    %488 = vmatpush.msra.mxu0 %v459
    %489 = vmatpush.msra.mxu0 %v458
    %490 = vmatpush.msra.mxu0 %v457
    %491 = vmatmul.f32.gmra.mxu0 %v464
    %v492 = vpop.f32.mrf.mxu0
    %v493 = vadd.f32 0.0, %v492
    %494 = vmatmul.f32.gmra.mxu0 %v467
    %v495 = vpop.f32.mrf.mxu0
    %v496 = vadd.f32 0.0, %v495
    %497 = vmatmul.f32.gmra.mxu0 %v470
    %v498 = vpop.f32.mrf.mxu0
    %v499 = vadd.f32 0.0, %v498
    %500 = vdwg.mxu0
    %v502 = vrot.slane %v499, 2
    %v504 = vrot.slane %v499, 6
    %v507 = vrot.slane %v496, 2
    %v509 = vrot.slane %v496, 6
    %v512 = vrot.slane %v493, 2
    %v514 = vrot.slane %v493, 6
    %v516 = vsel %vm425, %v502, %v504
    %v517 = vsel %vm60, %v516, %v507
    %v518 = vsel %vm432, %v517, %v509
    %v519 = vsel %vm425, %v507, %v509
    %v520 = vsel %vm60, %v519, %v512
    %v521 = vsel %vm432, %v520, %v514
    %v522 = vsel %vm425, %v512, %v514
    %v523 = vsel %vm456, %v493, %v518
    %v524 = vsel %vm456, %v496, %v521
    %v525 = vsel %vm456, %v499, %v522
    %v526 = vld [vmem:[%s5] sm:$0x1]
    %v528 = vperm.slane %v526, 0
    %v530 = vadd.f32 %v523, %v528
    %v531 = vadd.f32 %v524, %v528
    %v532 = vadd.f32 %v525, %v528
    %s533 = scalar_lea.vmem %s3, 40
    %v534 = vld [vmem:[%s533] sm:$0xff]
    %v535 = vld [vmem:[%s533 + $0x8] sm:$0xff]
    %v536 = vld [vmem:[%s533 + $0x10] sm:$0xff]
    %v537 = vld [vmem:[%s533 + $0x18] sm:$0xff]
    %v538 = vld [vmem:[%s533 + $0x20] sm:$0xf]
    %v540 = vsel %vm60, %v538, 0
    %542 = vmatpush.msra.mxu0 0.0
    %543 = vmatpush.msra.mxu0 0.0
    %544 = vmatpush.msra.mxu0 0.0
    %545 = vmatpush.msra.mxu0 0.0
    %546 = vmatpush.msra.mxu0 0.0
    %547 = vmatpush.msra.mxu0 0.0
    %548 = vmatpush.msra.mxu0 0.0
    %549 = vmatpush.msra.mxu0 0.0
    %550 = vmatpush.msra.mxu0 0.0
    %551 = vmatpush.msra.mxu0 0.0
    %552 = vmatpush.msra.mxu0 0.0
    %553 = vmatpush.msra.mxu0 %v540
    %554 = vmatpush.msra.mxu0 %v537
    %555 = vmatpush.msra.mxu0 %v536
    %556 = vmatpush.msra.mxu0 %v535
    %557 = vmatpush.msra.mxu0 %v534
    %558 = vmatmul.f32.gmra.mxu0 %v464
    %v559 = vpop.f32.mrf.mxu0
    %v560 = vadd.f32 0.0, %v559
    %561 = vmatmul.f32.gmra.mxu0 %v467
    %v562 = vpop.f32.mrf.mxu0
    %v563 = vadd.f32 0.0, %v562
    %564 = vmatmul.f32.gmra.mxu0 %v470
    %v565 = vpop.f32.mrf.mxu0
    %v566 = vadd.f32 0.0, %v565
    %567 = vdwg.mxu0
    %v569 = vrot.slane %v566, 2
    %v571 = vrot.slane %v566, 6
    %v574 = vrot.slane %v563, 2
    %v576 = vrot.slane %v563, 6
    %v579 = vrot.slane %v560, 2
    %v581 = vrot.slane %v560, 6
    %v583 = vsel %vm425, %v569, %v571
    %v584 = vsel %vm60, %v583, %v574
    %v585 = vsel %vm432, %v584, %v576
    %v586 = vsel %vm425, %v574, %v576
    %v587 = vsel %vm60, %v586, %v579
    %v588 = vsel %vm432, %v587, %v581
    %v589 = vsel %vm425, %v579, %v581
    %v590 = vsel %vm456, %v560, %v585
    %v591 = vsel %vm456, %v563, %v588
    %v592 = vsel %vm456, %v566, %v589
    %s593 = scalar_lea.vmem %s5, 1
    %v594 = vld [vmem:[%s593] sm:$0x1]
    %v596 = vperm.slane %v594, 0
    %v598 = vadd.f32 %v590, %v596
    %v599 = vadd.f32 %v591, %v596
    %v600 = vadd.f32 %v592, %v596
    %s601 = scalar_lea.vmem %s3, 80
    %v602 = vld [vmem:[%s601] sm:$0xff]
    %v603 = vld [vmem:[%s601 + $0x8] sm:$0xff]
    %v604 = vld [vmem:[%s601 + $0x10] sm:$0xff]
    %v605 = vld [vmem:[%s601 + $0x18] sm:$0xff]
    %v606 = vld [vmem:[%s601 + $0x20] sm:$0xf]
    %v608 = vsel %vm60, %v606, 0
    %610 = vmatpush.msra.mxu0 0.0
    %611 = vmatpush.msra.mxu0 0.0
    %612 = vmatpush.msra.mxu0 0.0
    %613 = vmatpush.msra.mxu0 0.0
    %614 = vmatpush.msra.mxu0 0.0
    %615 = vmatpush.msra.mxu0 0.0
    %616 = vmatpush.msra.mxu0 0.0
    %617 = vmatpush.msra.mxu0 0.0
    %618 = vmatpush.msra.mxu0 0.0
    %619 = vmatpush.msra.mxu0 0.0
    %620 = vmatpush.msra.mxu0 0.0
    %621 = vmatpush.msra.mxu0 %v608
    %622 = vmatpush.msra.mxu0 %v605
    %623 = vmatpush.msra.mxu0 %v604
    %624 = vmatpush.msra.mxu0 %v603
    %625 = vmatpush.msra.mxu0 %v602
    %626 = vmatmul.f32.gmra.mxu0 %v464
    %v627 = vpop.f32.mrf.mxu0
    %v628 = vadd.f32 0.0, %v627
    %629 = vmatmul.f32.gmra.mxu0 %v467
    %v630 = vpop.f32.mrf.mxu0
    %v631 = vadd.f32 0.0, %v630
    %632 = vmatmul.f32.gmra.mxu0 %v470
    %v633 = vpop.f32.mrf.mxu0
    %v634 = vadd.f32 0.0, %v633
    %635 = vdwg.mxu0
    %v637 = vrot.slane %v634, 2
    %v639 = vrot.slane %v634, 6
    %v642 = vrot.slane %v631, 2
    %v644 = vrot.slane %v631, 6
    %v647 = vrot.slane %v628, 2
    %v649 = vrot.slane %v628, 6
    %v651 = vsel %vm425, %v637, %v639
    %v652 = vsel %vm60, %v651, %v642
    %v653 = vsel %vm432, %v652, %v644
    %v654 = vsel %vm425, %v642, %v644
    %v655 = vsel %vm60, %v654, %v647
    %v656 = vsel %vm432, %v655, %v649
    %v657 = vsel %vm425, %v647, %v649
    %v658 = vsel %vm456, %v628, %v653
    %v659 = vsel %vm456, %v631, %v656
    %v660 = vsel %vm456, %v634, %v657
    %s661 = scalar_lea.vmem %s5, 2
    %v662 = vld [vmem:[%s661] sm:$0x1]
    %v664 = vperm.slane %v662, 0
    %v666 = vadd.f32 %v658, %v664
    %v667 = vadd.f32 %v659, %v664
    %v668 = vadd.f32 %v660, %v664
    %v669 = vld [vmem:[%s4] sm:$0xff]
    %v670 = vld [vmem:[%s4 + $0x8] sm:$0xff]
    %v671 = vld [vmem:[%s4 + $0x10] sm:$0xff]
    %v672 = vld [vmem:[%s4 + $0x18] sm:$0xff]
    %v673 = vld [vmem:[%s4 + $0x20] sm:$0xff]
    %v674 = vld [vmem:[%s4 + $0x28] sm:$0xff]
    %v675 = vld [vmem:[%s4 + $0x30] sm:$0xff]
    %v676 = vld [vmem:[%s4 + $0x38] sm:$0xff]
    %s677 = scalar_lea.vmem %s4, 64
    %v678 = vld [vmem:[%s677] sm:$0xff]
    %v679 = vld [vmem:[%s677 + $0x8] sm:$0xff]
    %v680 = vld [vmem:[%s677 + $0x10] sm:$0xff]
    %v681 = vld [vmem:[%s677 + $0x18] sm:$0xff]
    %v682 = vld [vmem:[%s677 + $0x20] sm:$0xff]
    %v683 = vld [vmem:[%s677 + $0x28] sm:$0xff]
    %v684 = vld [vmem:[%s677 + $0x30] sm:$0xff]
    %v685 = vld [vmem:[%s677 + $0x38] sm:$0xff]
    %s686 = scalar_lea.vmem %s4, 128
    %v687 = vld [vmem:[%s686] sm:$0xff]
    %v688 = vld [vmem:[%s686 + $0x8] sm:$0xff]
    %v689 = vld [vmem:[%s686 + $0x10] sm:$0xff]
    %v690 = vld [vmem:[%s686 + $0x18] sm:$0xff]
    %v691 = vld [vmem:[%s686 + $0x20] sm:$0xff]
    %v692 = vld [vmem:[%s686 + $0x28] sm:$0xff]
    %v693 = vld [vmem:[%s686 + $0x30] sm:$0xff]
    %v694 = vld [vmem:[%s686 + $0x38] sm:$0xff]
    %v695 = vld [vmem:[%s6] sm:$0x1]
    %vm696 = vcmask 523264
    %v698 = vsel %vm696, 0.0, 0
    %700 = vmatpush.msra.mxu0 0.0
    %701 = vmatpush.msra.mxu0 0.0
    %702 = vmatpush.msra.mxu0 0.0
    %703 = vmatpush.msra.mxu0 0.0
    %704 = vmatpush.msra.mxu0 0.0
    %705 = vmatpush.msra.mxu0 0.0
    %706 = vmatpush.msra.mxu0 0.0
    %707 = vmatpush.msra.mxu0 0.0
    %708 = vmatpush.msra.mxu0 %v676
    %709 = vmatpush.msra.mxu0 %v675
    %710 = vmatpush.msra.mxu0 %v674
    %711 = vmatpush.msra.mxu0 %v673
    %712 = vmatpush.msra.mxu0 %v672
    %713 = vmatpush.msra.mxu0 %v671
    %714 = vmatpush.msra.mxu0 %v670
    %715 = vmatpush.msra.mxu0 %v669
    %716 = vmatmul.f32.gmra.mxu0 %v698
    %v717 = vpop.f32.mrf.mxu0
    %v718 = vadd.f32 0.0, %v717
    %719 = vdwg.mxu0
    %720 = vmatpush.msra.mxu0 0.0
    %721 = vmatpush.msra.mxu0 0.0
    %722 = vmatpush.msra.mxu0 0.0
    %723 = vmatpush.msra.mxu0 0.0
    %724 = vmatpush.msra.mxu0 0.0
    %725 = vmatpush.msra.mxu0 0.0
    %726 = vmatpush.msra.mxu0 0.0
    %727 = vmatpush.msra.mxu0 0.0
    %728 = vmatpush.msra.mxu0 %v685
    %729 = vmatpush.msra.mxu0 %v684
    %730 = vmatpush.msra.mxu0 %v683
    %731 = vmatpush.msra.mxu0 %v682
    %732 = vmatpush.msra.mxu0 %v681
    %733 = vmatpush.msra.mxu0 %v680
    %734 = vmatpush.msra.mxu0 %v679
    %735 = vmatpush.msra.mxu0 %v678
    %736 = vmatmul.f32.gmra.mxu0 %v698
    %v737 = vpop.f32.mrf.mxu0
    %v738 = vadd.f32 0.0, %v737
    %739 = vdwg.mxu0
    %v741 = vperm.slane %v695, 0
    %743 = vmatpush.msra.mxu0 0.0
    %744 = vmatpush.msra.mxu0 0.0
    %745 = vmatpush.msra.mxu0 0.0
    %746 = vmatpush.msra.mxu0 0.0
    %747 = vmatpush.msra.mxu0 0.0
    %748 = vmatpush.msra.mxu0 0.0
    %749 = vmatpush.msra.mxu0 0.0
    %750 = vmatpush.msra.mxu0 0.0
    %751 = vmatpush.msra.mxu0 %v694
    %752 = vmatpush.msra.mxu0 %v693
    %753 = vmatpush.msra.mxu0 %v692
    %754 = vmatpush.msra.mxu0 %v691
    %755 = vmatpush.msra.mxu0 %v690
    %756 = vmatpush.msra.mxu0 %v689
    %757 = vmatpush.msra.mxu0 %v688
    %758 = vmatpush.msra.mxu0 %v687
    %759 = vmatmul.f32.gmra.mxu0 %v698
    %v760 = vpop.f32.mrf.mxu0
    %v761 = vadd.f32 %v741, %v760
    %762 = vdwg.mxu0
    %v763 = vadd.f32 %v530, %v718
    %v764 = vxor.u32 %v763, 2147483648
    %v765 = vmul.f32 %v764, 1.442695
    %v766 = vpow.pop %v765
    %v767 = vadd.f32 %v766, 1.0
    %v768 = vrcp.pop %v767
    %v769 = vmul.f32 %v767, %v768
    %v770 = vsub.f32 1.0, %v769
    %v771 = vmul.f32 %v768, %v770
    %v772 = vadd.f32 %v768, %v771
    %vm773 = vweird.f32 %v767
    %vm774 = vweird.f32 %v768
    %vm775 = vmor %vm773, %vm774
    %v776 = vsel %vm775, %v768, %v772
    %v777 = vand.u32 2147483647, %v767
    %vm778 = vcmp.eq.f32.partialorder %v777, 8.507059e+37
    %v779 = vand.u32 %v767, 2147483648
    %v780 = vor.u32 1.1754944e-38, %v779
    %v781 = vsel %vm778, %v780, %v776
    %v782 = vmul.f32 1.0, %v781
    %v783 = vadd.f32 %v598, %v738
    %v784 = vxor.u32 %v783, 2147483648
    %v785 = vmul.f32 %v784, 1.442695
    %v786 = vpow.pop %v785
    %v787 = vadd.f32 %v786, 1.0
    %v788 = vrcp.pop %v787
    %v789 = vmul.f32 %v787, %v788
    %v790 = vsub.f32 1.0, %v789
    %v791 = vmul.f32 %v788, %v790
    %v792 = vadd.f32 %v788, %v791
    %vm793 = vweird.f32 %v787
    %vm794 = vweird.f32 %v788
    %vm795 = vmor %vm793, %vm794
    %v796 = vsel %vm795, %v788, %v792
    %v797 = vand.u32 2147483647, %v787
    %vm798 = vcmp.eq.f32.partialorder %v797, 8.507059e+37
    %v799 = vand.u32 %v787, 2147483648
    %v800 = vor.u32 1.1754944e-38, %v799
    %v801 = vsel %vm798, %v800, %v796
    %v802 = vmul.f32 1.0, %v801
    %v803 = vmul.f32 %v782, %v761
    %v804 = vadd.f32 %v666, %v803
    %v805 = vtanh.pop %v804
    %v806 = vsub.f32 1.0, %v802
    %v807 = vmul.f32 %v806, %v805
    %v808 = vmul.f32 %v802, 0.0
    %v809 = vadd.f32 %v807, %v808
    %v811 = vsel %vm696, %v809, 0
    %813 = vmatpush.msra.mxu0 0.0
    %814 = vmatpush.msra.mxu0 0.0
    %815 = vmatpush.msra.mxu0 0.0
    %816 = vmatpush.msra.mxu0 0.0
    %817 = vmatpush.msra.mxu0 0.0
    %818 = vmatpush.msra.mxu0 0.0
    %819 = vmatpush.msra.mxu0 0.0
    %820 = vmatpush.msra.mxu0 0.0
    %821 = vmatpush.msra.mxu0 %v676
    %822 = vmatpush.msra.mxu0 %v675
    %823 = vmatpush.msra.mxu0 %v674
    %824 = vmatpush.msra.mxu0 %v673
    %825 = vmatpush.msra.mxu0 %v672
    %826 = vmatpush.msra.mxu0 %v671
    %827 = vmatpush.msra.mxu0 %v670
    %828 = vmatpush.msra.mxu0 %v669
    %829 = vmatmul.f32.gmra.mxu0 %v811
    %v830 = vpop.f32.mrf.mxu0
    %v831 = vadd.f32 0.0, %v830
    %832 = vdwg.mxu0
    %833 = vmatpush.msra.mxu0 0.0
    %834 = vmatpush.msra.mxu0 0.0
    %835 = vmatpush.msra.mxu0 0.0
    %836 = vmatpush.msra.mxu0 0.0
    %837 = vmatpush.msra.mxu0 0.0
    %838 = vmatpush.msra.mxu0 0.0
    %839 = vmatpush.msra.mxu0 0.0
    %840 = vmatpush.msra.mxu0 0.0
    %841 = vmatpush.msra.mxu0 %v685
    %842 = vmatpush.msra.mxu0 %v684
    %843 = vmatpush.msra.mxu0 %v683
    %844 = vmatpush.msra.mxu0 %v682
    %845 = vmatpush.msra.mxu0 %v681
    %846 = vmatpush.msra.mxu0 %v680
    %847 = vmatpush.msra.mxu0 %v679
    %848 = vmatpush.msra.mxu0 %v678
    %849 = vmatmul.f32.gmra.mxu0 %v811
    %v850 = vpop.f32.mrf.mxu0
    %v851 = vadd.f32 0.0, %v850
    %852 = vdwg.mxu0
    %853 = vmatpush.msra.mxu0 0.0
    %854 = vmatpush.msra.mxu0 0.0
    %855 = vmatpush.msra.mxu0 0.0
    %856 = vmatpush.msra.mxu0 0.0
    %857 = vmatpush.msra.mxu0 0.0
    %858 = vmatpush.msra.mxu0 0.0
    %859 = vmatpush.msra.mxu0 0.0
    %860 = vmatpush.msra.mxu0 0.0
    %861 = vmatpush.msra.mxu0 %v694
    %862 = vmatpush.msra.mxu0 %v693
    %863 = vmatpush.msra.mxu0 %v692
    %864 = vmatpush.msra.mxu0 %v691
    %865 = vmatpush.msra.mxu0 %v690
    %866 = vmatpush.msra.mxu0 %v689
    %867 = vmatpush.msra.mxu0 %v688
    %868 = vmatpush.msra.mxu0 %v687
    %869 = vmatmul.f32.gmra.mxu0 %v811
    %v870 = vpop.f32.mrf.mxu0
    %v871 = vadd.f32 %v741, %v870
    %872 = vdwg.mxu0
    %v874 = vrot.slane %v831, 6
    %v876 = vadd.f32 %v530, %v874
    %v877 = vxor.u32 %v876, 2147483648
    %v878 = vmul.f32 %v877, 1.442695
    %v879 = vpow.pop %v878
    %v880 = vadd.f32 %v879, 1.0
    %v881 = vrcp.pop %v880
    %v882 = vmul.f32 %v880, %v881
    %v883 = vsub.f32 1.0, %v882
    %v884 = vmul.f32 %v881, %v883
    %v885 = vadd.f32 %v881, %v884
    %vm886 = vweird.f32 %v880
    %vm887 = vweird.f32 %v881
    %vm888 = vmor %vm886, %vm887
    %v889 = vsel %vm888, %v881, %v885
    %v890 = vand.u32 2147483647, %v880
    %vm891 = vcmp.eq.f32.partialorder %v890, 8.507059e+37
    %v892 = vand.u32 %v880, 2147483648
    %v893 = vor.u32 1.1754944e-38, %v892
    %v894 = vsel %vm891, %v893, %v889
    %v895 = vmul.f32 1.0, %v894
    %v897 = vrot.slane %v851, 6
    %v899 = vadd.f32 %v598, %v897
    %v900 = vxor.u32 %v899, 2147483648
    %v901 = vmul.f32 %v900, 1.442695
    %v902 = vpow.pop %v901
    %v903 = vadd.f32 %v902, 1.0
    %v904 = vrcp.pop %v903
    %v905 = vmul.f32 %v903, %v904
    %v906 = vsub.f32 1.0, %v905
    %v907 = vmul.f32 %v904, %v906
    %v908 = vadd.f32 %v904, %v907
    %vm909 = vweird.f32 %v903
    %vm910 = vweird.f32 %v904
    %vm911 = vmor %vm909, %vm910
    %v912 = vsel %vm911, %v904, %v908
    %v913 = vand.u32 2147483647, %v903
    %vm914 = vcmp.eq.f32.partialorder %v913, 8.507059e+37
    %v915 = vand.u32 %v903, 2147483648
    %v916 = vor.u32 1.1754944e-38, %v915
    %v917 = vsel %vm914, %v916, %v912
    %v918 = vmul.f32 1.0, %v917
    %v920 = vrot.slane %v871, 6
    %v922 = vmul.f32 %v895, %v920
    %v923 = vadd.f32 %v666, %v922
    %v924 = vtanh.pop %v923
    %v925 = vsub.f32 1.0, %v918
    %v926 = vmul.f32 %v925, %v924
    %v927 = vrot.slane %v809, 6
    %v929 = vmul.f32 %v918, %v927
    %v930 = vadd.f32 %v926, %v929
    %v932 = vrot.slane %v930, 2
    %v933 = vsel %vm696, %v932, 0
    %935 = vmatpush.msra.mxu0 0.0
    %936 = vmatpush.msra.mxu0 0.0
    %937 = vmatpush.msra.mxu0 0.0
    %938 = vmatpush.msra.mxu0 0.0
    %939 = vmatpush.msra.mxu0 0.0
    %940 = vmatpush.msra.mxu0 0.0
    %941 = vmatpush.msra.mxu0 0.0
    %942 = vmatpush.msra.mxu0 0.0
    %943 = vmatpush.msra.mxu0 %v676
    %944 = vmatpush.msra.mxu0 %v675
    %945 = vmatpush.msra.mxu0 %v674
    %946 = vmatpush.msra.mxu0 %v673
    %947 = vmatpush.msra.mxu0 %v672
    %948 = vmatpush.msra.mxu0 %v671
    %949 = vmatpush.msra.mxu0 %v670
    %950 = vmatpush.msra.mxu0 %v669
    %951 = vmatmul.f32.gmra.mxu0 %v933
    %v952 = vpop.f32.mrf.mxu0
    %v953 = vadd.f32 0.0, %v952
    %954 = vdwg.mxu0
    %955 = vmatpush.msra.mxu0 0.0
    %956 = vmatpush.msra.mxu0 0.0
    %957 = vmatpush.msra.mxu0 0.0
    %958 = vmatpush.msra.mxu0 0.0
    %959 = vmatpush.msra.mxu0 0.0
    %960 = vmatpush.msra.mxu0 0.0
    %961 = vmatpush.msra.mxu0 0.0
    %962 = vmatpush.msra.mxu0 0.0
    %963 = vmatpush.msra.mxu0 %v685
    %964 = vmatpush.msra.mxu0 %v684
    %965 = vmatpush.msra.mxu0 %v683
    %966 = vmatpush.msra.mxu0 %v682
    %967 = vmatpush.msra.mxu0 %v681
    %968 = vmatpush.msra.mxu0 %v680
    %969 = vmatpush.msra.mxu0 %v679
    %970 = vmatpush.msra.mxu0 %v678
    %971 = vmatmul.f32.gmra.mxu0 %v933
    %v972 = vpop.f32.mrf.mxu0
    %v973 = vadd.f32 0.0, %v972
    %974 = vdwg.mxu0
    %975 = vmatpush.msra.mxu0 0.0
    %976 = vmatpush.msra.mxu0 0.0
    %977 = vmatpush.msra.mxu0 0.0
    %978 = vmatpush.msra.mxu0 0.0
    %979 = vmatpush.msra.mxu0 0.0
    %980 = vmatpush.msra.mxu0 0.0
    %981 = vmatpush.msra.mxu0 0.0
    %982 = vmatpush.msra.mxu0 0.0
    %983 = vmatpush.msra.mxu0 %v694
    %984 = vmatpush.msra.mxu0 %v693
    %985 = vmatpush.msra.mxu0 %v692
    %986 = vmatpush.msra.mxu0 %v691
    %987 = vmatpush.msra.mxu0 %v690
    %988 = vmatpush.msra.mxu0 %v689
    %989 = vmatpush.msra.mxu0 %v688
    %990 = vmatpush.msra.mxu0 %v687
    %991 = vmatmul.f32.gmra.mxu0 %v933
    %v992 = vpop.f32.mrf.mxu0
    %v993 = vadd.f32 %v741, %v992
    %994 = vdwg.mxu0
    %v996 = vrot.slane %v953, 4
    %v998 = vadd.f32 %v530, %v996
    %v999 = vxor.u32 %v998, 2147483648
    %v1000 = vmul.f32 %v999, 1.442695
    %v1001 = vpow.pop %v1000
    %v1002 = vadd.f32 %v1001, 1.0
    %v1003 = vrcp.pop %v1002
    %v1004 = vmul.f32 %v1002, %v1003
    %v1005 = vsub.f32 1.0, %v1004
    %v1006 = vmul.f32 %v1003, %v1005
    %v1007 = vadd.f32 %v1003, %v1006
    %vm1008 = vweird.f32 %v1002
    %vm1009 = vweird.f32 %v1003
    %vm1010 = vmor %vm1008, %vm1009
    %v1011 = vsel %vm1010, %v1003, %v1007
    %v1012 = vand.u32 2147483647, %v1002
    %vm1013 = vcmp.eq.f32.partialorder %v1012, 8.507059e+37
    %v1014 = vand.u32 %v1002, 2147483648
    %v1015 = vor.u32 1.1754944e-38, %v1014
    %v1016 = vsel %vm1013, %v1015, %v1011
    %v1017 = vmul.f32 1.0, %v1016
    %v1019 = vrot.slane %v973, 4
    %v1021 = vadd.f32 %v598, %v1019
    %v1022 = vxor.u32 %v1021, 2147483648
    %v1023 = vmul.f32 %v1022, 1.442695
    %v1024 = vpow.pop %v1023
    %v1025 = vadd.f32 %v1024, 1.0
    %v1026 = vrcp.pop %v1025
    %v1027 = vmul.f32 %v1025, %v1026
    %v1028 = vsub.f32 1.0, %v1027
    %v1029 = vmul.f32 %v1026, %v1028
    %v1030 = vadd.f32 %v1026, %v1029
    %vm1031 = vweird.f32 %v1025
    %vm1032 = vweird.f32 %v1026
    %vm1033 = vmor %vm1031, %vm1032
    %v1034 = vsel %vm1033, %v1026, %v1030
    %v1035 = vand.u32 2147483647, %v1025
    %vm1036 = vcmp.eq.f32.partialorder %v1035, 8.507059e+37
    %v1037 = vand.u32 %v1025, 2147483648
    %v1038 = vor.u32 1.1754944e-38, %v1037
    %v1039 = vsel %vm1036, %v1038, %v1034
    %v1040 = vmul.f32 1.0, %v1039
    %v1042 = vrot.slane %v993, 4
    %v1044 = vmul.f32 %v1017, %v1042
    %v1045 = vadd.f32 %v666, %v1044
    %v1046 = vtanh.pop %v1045
    %v1047 = vsub.f32 1.0, %v1040
    %v1048 = vmul.f32 %v1047, %v1046
    %v1049 = vrot.slane %v930, 6
    %v1051 = vmul.f32 %v1040, %v1049
    %v1052 = vadd.f32 %v1048, %v1051
    %v1054 = vrot.slane %v1052, 4
    %v1055 = vsel %vm696, %v1054, 0
    %1057 = vmatpush.msra.mxu0 0.0
    %1058 = vmatpush.msra.mxu0 0.0
    %1059 = vmatpush.msra.mxu0 0.0
    %1060 = vmatpush.msra.mxu0 0.0
    %1061 = vmatpush.msra.mxu0 0.0
    %1062 = vmatpush.msra.mxu0 0.0
    %1063 = vmatpush.msra.mxu0 0.0
    %1064 = vmatpush.msra.mxu0 0.0
    %1065 = vmatpush.msra.mxu0 %v676
    %1066 = vmatpush.msra.mxu0 %v675
    %1067 = vmatpush.msra.mxu0 %v674
    %1068 = vmatpush.msra.mxu0 %v673
    %1069 = vmatpush.msra.mxu0 %v672
    %1070 = vmatpush.msra.mxu0 %v671
    %1071 = vmatpush.msra.mxu0 %v670
    %1072 = vmatpush.msra.mxu0 %v669
    %1073 = vmatmul.f32.gmra.mxu0 %v1055
    %v1074 = vpop.f32.mrf.mxu0
    %v1075 = vadd.f32 0.0, %v1074
    %1076 = vdwg.mxu0
    %1077 = vmatpush.msra.mxu0 0.0
    %1078 = vmatpush.msra.mxu0 0.0
    %1079 = vmatpush.msra.mxu0 0.0
    %1080 = vmatpush.msra.mxu0 0.0
    %1081 = vmatpush.msra.mxu0 0.0
    %1082 = vmatpush.msra.mxu0 0.0
    %1083 = vmatpush.msra.mxu0 0.0
    %1084 = vmatpush.msra.mxu0 0.0
    %1085 = vmatpush.msra.mxu0 %v685
    %1086 = vmatpush.msra.mxu0 %v684
    %1087 = vmatpush.msra.mxu0 %v683
    %1088 = vmatpush.msra.mxu0 %v682
    %1089 = vmatpush.msra.mxu0 %v681
    %1090 = vmatpush.msra.mxu0 %v680
    %1091 = vmatpush.msra.mxu0 %v679
    %1092 = vmatpush.msra.mxu0 %v678
    %1093 = vmatmul.f32.gmra.mxu0 %v1055
    %v1094 = vpop.f32.mrf.mxu0
    %v1095 = vadd.f32 0.0, %v1094
    %1096 = vdwg.mxu0
    %1097 = vmatpush.msra.mxu0 0.0
    %1098 = vmatpush.msra.mxu0 0.0
    %1099 = vmatpush.msra.mxu0 0.0
    %1100 = vmatpush.msra.mxu0 0.0
    %1101 = vmatpush.msra.mxu0 0.0
    %1102 = vmatpush.msra.mxu0 0.0
    %1103 = vmatpush.msra.mxu0 0.0
    %1104 = vmatpush.msra.mxu0 0.0
    %1105 = vmatpush.msra.mxu0 %v694
    %1106 = vmatpush.msra.mxu0 %v693
    %1107 = vmatpush.msra.mxu0 %v692
    %1108 = vmatpush.msra.mxu0 %v691
    %1109 = vmatpush.msra.mxu0 %v690
    %1110 = vmatpush.msra.mxu0 %v689
    %1111 = vmatpush.msra.mxu0 %v688
    %1112 = vmatpush.msra.mxu0 %v687
    %1113 = vmatmul.f32.gmra.mxu0 %v1055
    %v1114 = vpop.f32.mrf.mxu0
    %v1115 = vadd.f32 %v741, %v1114
    %1116 = vdwg.mxu0
    %v1118 = vrot.slane %v1075, 2
    %v1120 = vadd.f32 %v530, %v1118
    %v1121 = vxor.u32 %v1120, 2147483648
    %v1122 = vmul.f32 %v1121, 1.442695
    %v1123 = vpow.pop %v1122
    %v1124 = vadd.f32 %v1123, 1.0
    %v1125 = vrcp.pop %v1124
    %v1126 = vmul.f32 %v1124, %v1125
    %v1127 = vsub.f32 1.0, %v1126
    %v1128 = vmul.f32 %v1125, %v1127
    %v1129 = vadd.f32 %v1125, %v1128
    %vm1130 = vweird.f32 %v1124
    %vm1131 = vweird.f32 %v1125
    %vm1132 = vmor %vm1130, %vm1131
    %v1133 = vsel %vm1132, %v1125, %v1129
    %v1134 = vand.u32 2147483647, %v1124
    %vm1135 = vcmp.eq.f32.partialorder %v1134, 8.507059e+37
    %v1136 = vand.u32 %v1124, 2147483648
    %v1137 = vor.u32 1.1754944e-38, %v1136
    %v1138 = vsel %vm1135, %v1137, %v1133
    %v1139 = vmul.f32 1.0, %v1138
    %v1141 = vrot.slane %v1095, 2
    %v1143 = vadd.f32 %v598, %v1141
    %v1144 = vxor.u32 %v1143, 2147483648
    %v1145 = vmul.f32 %v1144, 1.442695
    %v1146 = vpow.pop %v1145
    %v1147 = vadd.f32 %v1146, 1.0
    %v1148 = vrcp.pop %v1147
    %v1149 = vmul.f32 %v1147, %v1148
    %v1150 = vsub.f32 1.0, %v1149
    %v1151 = vmul.f32 %v1148, %v1150
    %v1152 = vadd.f32 %v1148, %v1151
    %vm1153 = vweird.f32 %v1147
    %vm1154 = vweird.f32 %v1148
    %vm1155 = vmor %vm1153, %vm1154
    %v1156 = vsel %vm1155, %v1148, %v1152
    %v1157 = vand.u32 2147483647, %v1147
    %vm1158 = vcmp.eq.f32.partialorder %v1157, 8.507059e+37
    %v1159 = vand.u32 %v1147, 2147483648
    %v1160 = vor.u32 1.1754944e-38, %v1159
    %v1161 = vsel %vm1158, %v1160, %v1156
    %v1162 = vmul.f32 1.0, %v1161
    %v1164 = vrot.slane %v1115, 2
    %v1166 = vmul.f32 %v1139, %v1164
    %v1167 = vadd.f32 %v666, %v1166
    %v1168 = vtanh.pop %v1167
    %v1169 = vsub.f32 1.0, %v1162
    %v1170 = vmul.f32 %v1169, %v1168
    %v1171 = vrot.slane %v1052, 6
    %v1173 = vmul.f32 %v1162, %v1171
    %v1174 = vadd.f32 %v1170, %v1173
    %v1176 = vrot.slane %v1174, 6
    %v1177 = vsel %vm696, %v1176, 0
    %1179 = vmatpush.msra.mxu0 0.0
    %1180 = vmatpush.msra.mxu0 0.0
    %1181 = vmatpush.msra.mxu0 0.0
    %1182 = vmatpush.msra.mxu0 0.0
    %1183 = vmatpush.msra.mxu0 0.0
    %1184 = vmatpush.msra.mxu0 0.0
    %1185 = vmatpush.msra.mxu0 0.0
    %1186 = vmatpush.msra.mxu0 0.0
    %1187 = vmatpush.msra.mxu0 %v676
    %1188 = vmatpush.msra.mxu0 %v675
    %1189 = vmatpush.msra.mxu0 %v674
    %1190 = vmatpush.msra.mxu0 %v673
    %1191 = vmatpush.msra.mxu0 %v672
    %1192 = vmatpush.msra.mxu0 %v671
    %1193 = vmatpush.msra.mxu0 %v670
    %1194 = vmatpush.msra.mxu0 %v669
    %1195 = vmatmul.f32.gmra.mxu0 %v1177
    %v1196 = vpop.f32.mrf.mxu0
    %v1197 = vadd.f32 0.0, %v1196
    %1198 = vdwg.mxu0
    %1199 = vmatpush.msra.mxu0 0.0
    %1200 = vmatpush.msra.mxu0 0.0
    %1201 = vmatpush.msra.mxu0 0.0
    %1202 = vmatpush.msra.mxu0 0.0
    %1203 = vmatpush.msra.mxu0 0.0
    %1204 = vmatpush.msra.mxu0 0.0
    %1205 = vmatpush.msra.mxu0 0.0
    %1206 = vmatpush.msra.mxu0 0.0
    %1207 = vmatpush.msra.mxu0 %v685
    %1208 = vmatpush.msra.mxu0 %v684
    %1209 = vmatpush.msra.mxu0 %v683
    %1210 = vmatpush.msra.mxu0 %v682
    %1211 = vmatpush.msra.mxu0 %v681
    %1212 = vmatpush.msra.mxu0 %v680
    %1213 = vmatpush.msra.mxu0 %v679
    %1214 = vmatpush.msra.mxu0 %v678
    %1215 = vmatmul.f32.gmra.mxu0 %v1177
    %v1216 = vpop.f32.mrf.mxu0
    %v1217 = vadd.f32 0.0, %v1216
    %1218 = vdwg.mxu0
    %1219 = vmatpush.msra.mxu0 0.0
    %1220 = vmatpush.msra.mxu0 0.0
    %1221 = vmatpush.msra.mxu0 0.0
    %1222 = vmatpush.msra.mxu0 0.0
    %1223 = vmatpush.msra.mxu0 0.0
    %1224 = vmatpush.msra.mxu0 0.0
    %1225 = vmatpush.msra.mxu0 0.0
    %1226 = vmatpush.msra.mxu0 0.0
    %1227 = vmatpush.msra.mxu0 %v694
    %1228 = vmatpush.msra.mxu0 %v693
    %1229 = vmatpush.msra.mxu0 %v692
    %1230 = vmatpush.msra.mxu0 %v691
    %1231 = vmatpush.msra.mxu0 %v690
    %1232 = vmatpush.msra.mxu0 %v689
    %1233 = vmatpush.msra.mxu0 %v688
    %1234 = vmatpush.msra.mxu0 %v687
    %1235 = vmatmul.f32.gmra.mxu0 %v1177
    %v1236 = vpop.f32.mrf.mxu0
    %v1237 = vadd.f32 %v741, %v1236
    %1238 = vdwg.mxu0
    %v1239 = vadd.f32 %v531, %v1197
    %v1240 = vxor.u32 %v1239, 2147483648
    %v1241 = vmul.f32 %v1240, 1.442695
    %v1242 = vpow.pop %v1241
    %v1243 = vadd.f32 %v1242, 1.0
    %v1244 = vrcp.pop %v1243
    %v1245 = vmul.f32 %v1243, %v1244
    %v1246 = vsub.f32 1.0, %v1245
    %v1247 = vmul.f32 %v1244, %v1246
    %v1248 = vadd.f32 %v1244, %v1247
    %vm1249 = vweird.f32 %v1243
    %vm1250 = vweird.f32 %v1244
    %vm1251 = vmor %vm1249, %vm1250
    %v1252 = vsel %vm1251, %v1244, %v1248
    %v1253 = vand.u32 2147483647, %v1243
    %vm1254 = vcmp.eq.f32.partialorder %v1253, 8.507059e+37
    %v1255 = vand.u32 %v1243, 2147483648
    %v1256 = vor.u32 1.1754944e-38, %v1255
    %v1257 = vsel %vm1254, %v1256, %v1252
    %v1258 = vmul.f32 1.0, %v1257
    %v1259 = vadd.f32 %v599, %v1217
    %v1260 = vxor.u32 %v1259, 2147483648
    %v1261 = vmul.f32 %v1260, 1.442695
    %v1262 = vpow.pop %v1261
    %v1263 = vadd.f32 %v1262, 1.0
    %v1264 = vrcp.pop %v1263
    %v1265 = vmul.f32 %v1263, %v1264
    %v1266 = vsub.f32 1.0, %v1265
    %v1267 = vmul.f32 %v1264, %v1266
    %v1268 = vadd.f32 %v1264, %v1267
    %vm1269 = vweird.f32 %v1263
    %vm1270 = vweird.f32 %v1264
    %vm1271 = vmor %vm1269, %vm1270
    %v1272 = vsel %vm1271, %v1264, %v1268
    %v1273 = vand.u32 2147483647, %v1263
    %vm1274 = vcmp.eq.f32.partialorder %v1273, 8.507059e+37
    %v1275 = vand.u32 %v1263, 2147483648
    %v1276 = vor.u32 1.1754944e-38, %v1275
    %v1277 = vsel %vm1274, %v1276, %v1272
    %v1278 = vmul.f32 1.0, %v1277
    %v1279 = vmul.f32 %v1258, %v1237
    %v1280 = vadd.f32 %v667, %v1279
    %v1281 = vtanh.pop %v1280
    %v1282 = vsub.f32 1.0, %v1278
    %v1283 = vmul.f32 %v1282, %v1281
    %v1285 = vmul.f32 %v1278, %v1176
    %v1286 = vadd.f32 %v1283, %v1285
    %v1288 = vsel %vm696, %v1286, 0
    %1290 = vmatpush.msra.mxu0 0.0
    %1291 = vmatpush.msra.mxu0 0.0
    %1292 = vmatpush.msra.mxu0 0.0
    %1293 = vmatpush.msra.mxu0 0.0
    %1294 = vmatpush.msra.mxu0 0.0
    %1295 = vmatpush.msra.mxu0 0.0
    %1296 = vmatpush.msra.mxu0 0.0
    %1297 = vmatpush.msra.mxu0 0.0
    %1298 = vmatpush.msra.mxu0 %v676
    %1299 = vmatpush.msra.mxu0 %v675
    %1300 = vmatpush.msra.mxu0 %v674
    %1301 = vmatpush.msra.mxu0 %v673
    %1302 = vmatpush.msra.mxu0 %v672
    %1303 = vmatpush.msra.mxu0 %v671
    %1304 = vmatpush.msra.mxu0 %v670
    %1305 = vmatpush.msra.mxu0 %v669
    %1306 = vmatmul.f32.gmra.mxu0 %v1288
    %v1307 = vpop.f32.mrf.mxu0
    %v1308 = vadd.f32 0.0, %v1307
    %1309 = vdwg.mxu0
    %1310 = vmatpush.msra.mxu0 0.0
    %1311 = vmatpush.msra.mxu0 0.0
    %1312 = vmatpush.msra.mxu0 0.0
    %1313 = vmatpush.msra.mxu0 0.0
    %1314 = vmatpush.msra.mxu0 0.0
    %1315 = vmatpush.msra.mxu0 0.0
    %1316 = vmatpush.msra.mxu0 0.0
    %1317 = vmatpush.msra.mxu0 0.0
    %1318 = vmatpush.msra.mxu0 %v685
    %1319 = vmatpush.msra.mxu0 %v684
    %1320 = vmatpush.msra.mxu0 %v683
    %1321 = vmatpush.msra.mxu0 %v682
    %1322 = vmatpush.msra.mxu0 %v681
    %1323 = vmatpush.msra.mxu0 %v680
    %1324 = vmatpush.msra.mxu0 %v679
    %1325 = vmatpush.msra.mxu0 %v678
    %1326 = vmatmul.f32.gmra.mxu0 %v1288
    %v1327 = vpop.f32.mrf.mxu0
    %v1328 = vadd.f32 0.0, %v1327
    %1329 = vdwg.mxu0
    %1330 = vmatpush.msra.mxu0 0.0
    %1331 = vmatpush.msra.mxu0 0.0
    %1332 = vmatpush.msra.mxu0 0.0
    %1333 = vmatpush.msra.mxu0 0.0
    %1334 = vmatpush.msra.mxu0 0.0
    %1335 = vmatpush.msra.mxu0 0.0
    %1336 = vmatpush.msra.mxu0 0.0
    %1337 = vmatpush.msra.mxu0 0.0
    %1338 = vmatpush.msra.mxu0 %v694
    %1339 = vmatpush.msra.mxu0 %v693
    %1340 = vmatpush.msra.mxu0 %v692
    %1341 = vmatpush.msra.mxu0 %v691
    %1342 = vmatpush.msra.mxu0 %v690
    %1343 = vmatpush.msra.mxu0 %v689
    %1344 = vmatpush.msra.mxu0 %v688
    %1345 = vmatpush.msra.mxu0 %v687
    %1346 = vmatmul.f32.gmra.mxu0 %v1288
    %v1347 = vpop.f32.mrf.mxu0
    %v1348 = vadd.f32 %v741, %v1347
    %1349 = vdwg.mxu0
    %v1351 = vrot.slane %v1308, 6
    %v1353 = vadd.f32 %v531, %v1351
    %v1354 = vxor.u32 %v1353, 2147483648
    %v1355 = vmul.f32 %v1354, 1.442695
    %v1356 = vpow.pop %v1355
    %v1357 = vadd.f32 %v1356, 1.0
    %v1358 = vrcp.pop %v1357
    %v1359 = vmul.f32 %v1357, %v1358
    %v1360 = vsub.f32 1.0, %v1359
    %v1361 = vmul.f32 %v1358, %v1360
    %v1362 = vadd.f32 %v1358, %v1361
    %vm1363 = vweird.f32 %v1357
    %vm1364 = vweird.f32 %v1358
    %vm1365 = vmor %vm1363, %vm1364
    %v1366 = vsel %vm1365, %v1358, %v1362
    %v1367 = vand.u32 2147483647, %v1357
    %vm1368 = vcmp.eq.f32.partialorder %v1367, 8.507059e+37
    %v1369 = vand.u32 %v1357, 2147483648
    %v1370 = vor.u32 1.1754944e-38, %v1369
    %v1371 = vsel %vm1368, %v1370, %v1366
    %v1372 = vmul.f32 1.0, %v1371
    %v1374 = vrot.slane %v1328, 6
    %v1376 = vadd.f32 %v599, %v1374
    %v1377 = vxor.u32 %v1376, 2147483648
    %v1378 = vmul.f32 %v1377, 1.442695
    %v1379 = vpow.pop %v1378
    %v1380 = vadd.f32 %v1379, 1.0
    %v1381 = vrcp.pop %v1380
    %v1382 = vmul.f32 %v1380, %v1381
    %v1383 = vsub.f32 1.0, %v1382
    %v1384 = vmul.f32 %v1381, %v1383
    %v1385 = vadd.f32 %v1381, %v1384
    %vm1386 = vweird.f32 %v1380
    %vm1387 = vweird.f32 %v1381
    %vm1388 = vmor %vm1386, %vm1387
    %v1389 = vsel %vm1388, %v1381, %v1385
    %v1390 = vand.u32 2147483647, %v1380
    %vm1391 = vcmp.eq.f32.partialorder %v1390, 8.507059e+37
    %v1392 = vand.u32 %v1380, 2147483648
    %v1393 = vor.u32 1.1754944e-38, %v1392
    %v1394 = vsel %vm1391, %v1393, %v1389
    %v1395 = vmul.f32 1.0, %v1394
    %v1397 = vrot.slane %v1348, 6
    %v1399 = vmul.f32 %v1372, %v1397
    %v1400 = vadd.f32 %v667, %v1399
    %v1401 = vtanh.pop %v1400
    %v1402 = vsub.f32 1.0, %v1395
    %v1403 = vmul.f32 %v1402, %v1401
    %v1404 = vrot.slane %v1286, 6
    %v1406 = vmul.f32 %v1395, %v1404
    %v1407 = vadd.f32 %v1403, %v1406
    %v1409 = vrot.slane %v1407, 2
    %v1410 = vsel %vm696, %v1409, 0
    %1412 = vmatpush.msra.mxu0 0.0
    %1413 = vmatpush.msra.mxu0 0.0
    %1414 = vmatpush.msra.mxu0 0.0
    %1415 = vmatpush.msra.mxu0 0.0
    %1416 = vmatpush.msra.mxu0 0.0
    %1417 = vmatpush.msra.mxu0 0.0
    %1418 = vmatpush.msra.mxu0 0.0
    %1419 = vmatpush.msra.mxu0 0.0
    %1420 = vmatpush.msra.mxu0 %v676
    %1421 = vmatpush.msra.mxu0 %v675
    %1422 = vmatpush.msra.mxu0 %v674
    %1423 = vmatpush.msra.mxu0 %v673
    %1424 = vmatpush.msra.mxu0 %v672
    %1425 = vmatpush.msra.mxu0 %v671
    %1426 = vmatpush.msra.mxu0 %v670
    %1427 = vmatpush.msra.mxu0 %v669
    %1428 = vmatmul.f32.gmra.mxu0 %v1410
    %v1429 = vpop.f32.mrf.mxu0
    %v1430 = vadd.f32 0.0, %v1429
    %1431 = vdwg.mxu0
    %1432 = vmatpush.msra.mxu0 0.0
    %1433 = vmatpush.msra.mxu0 0.0
    %1434 = vmatpush.msra.mxu0 0.0
    %1435 = vmatpush.msra.mxu0 0.0
    %1436 = vmatpush.msra.mxu0 0.0
    %1437 = vmatpush.msra.mxu0 0.0
    %1438 = vmatpush.msra.mxu0 0.0
    %1439 = vmatpush.msra.mxu0 0.0
    %1440 = vmatpush.msra.mxu0 %v685
    %1441 = vmatpush.msra.mxu0 %v684
    %1442 = vmatpush.msra.mxu0 %v683
    %1443 = vmatpush.msra.mxu0 %v682
    %1444 = vmatpush.msra.mxu0 %v681
    %1445 = vmatpush.msra.mxu0 %v680
    %1446 = vmatpush.msra.mxu0 %v679
    %1447 = vmatpush.msra.mxu0 %v678
    %1448 = vmatmul.f32.gmra.mxu0 %v1410
    %v1449 = vpop.f32.mrf.mxu0
    %v1450 = vadd.f32 0.0, %v1449
    %1451 = vdwg.mxu0
    %1452 = vmatpush.msra.mxu0 0.0
    %1453 = vmatpush.msra.mxu0 0.0
    %1454 = vmatpush.msra.mxu0 0.0
    %1455 = vmatpush.msra.mxu0 0.0
    %1456 = vmatpush.msra.mxu0 0.0
    %1457 = vmatpush.msra.mxu0 0.0
    %1458 = vmatpush.msra.mxu0 0.0
    %1459 = vmatpush.msra.mxu0 0.0
    %1460 = vmatpush.msra.mxu0 %v694
    %1461 = vmatpush.msra.mxu0 %v693
    %1462 = vmatpush.msra.mxu0 %v692
    %1463 = vmatpush.msra.mxu0 %v691
    %1464 = vmatpush.msra.mxu0 %v690
    %1465 = vmatpush.msra.mxu0 %v689
    %1466 = vmatpush.msra.mxu0 %v688
    %1467 = vmatpush.msra.mxu0 %v687
    %1468 = vmatmul.f32.gmra.mxu0 %v1410
    %v1469 = vpop.f32.mrf.mxu0
    %v1470 = vadd.f32 %v741, %v1469
    %1471 = vdwg.mxu0
    %v1473 = vrot.slane %v1430, 4
    %v1475 = vadd.f32 %v531, %v1473
    %v1476 = vxor.u32 %v1475, 2147483648
    %v1477 = vmul.f32 %v1476, 1.442695
    %v1478 = vpow.pop %v1477
    %v1479 = vadd.f32 %v1478, 1.0
    %v1480 = vrcp.pop %v1479
    %v1481 = vmul.f32 %v1479, %v1480
    %v1482 = vsub.f32 1.0, %v1481
    %v1483 = vmul.f32 %v1480, %v1482
    %v1484 = vadd.f32 %v1480, %v1483
    %vm1485 = vweird.f32 %v1479
    %vm1486 = vweird.f32 %v1480
    %vm1487 = vmor %vm1485, %vm1486
    %v1488 = vsel %vm1487, %v1480, %v1484
    %v1489 = vand.u32 2147483647, %v1479
    %vm1490 = vcmp.eq.f32.partialorder %v1489, 8.507059e+37
    %v1491 = vand.u32 %v1479, 2147483648
    %v1492 = vor.u32 1.1754944e-38, %v1491
    %v1493 = vsel %vm1490, %v1492, %v1488
    %v1494 = vmul.f32 1.0, %v1493
    %v1496 = vrot.slane %v1450, 4
    %v1498 = vadd.f32 %v599, %v1496
    %v1499 = vxor.u32 %v1498, 2147483648
    %v1500 = vmul.f32 %v1499, 1.442695
    %v1501 = vpow.pop %v1500
    %v1502 = vadd.f32 %v1501, 1.0
    %v1503 = vrcp.pop %v1502
    %v1504 = vmul.f32 %v1502, %v1503
    %v1505 = vsub.f32 1.0, %v1504
    %v1506 = vmul.f32 %v1503, %v1505
    %v1507 = vadd.f32 %v1503, %v1506
    %vm1508 = vweird.f32 %v1502
    %vm1509 = vweird.f32 %v1503
    %vm1510 = vmor %vm1508, %vm1509
    %v1511 = vsel %vm1510, %v1503, %v1507
    %v1512 = vand.u32 2147483647, %v1502
    %vm1513 = vcmp.eq.f32.partialorder %v1512, 8.507059e+37
    %v1514 = vand.u32 %v1502, 2147483648
    %v1515 = vor.u32 1.1754944e-38, %v1514
    %v1516 = vsel %vm1513, %v1515, %v1511
    %v1517 = vmul.f32 1.0, %v1516
    %v1519 = vrot.slane %v1470, 4
    %v1521 = vmul.f32 %v1494, %v1519
    %v1522 = vadd.f32 %v667, %v1521
    %v1523 = vtanh.pop %v1522
    %v1524 = vsub.f32 1.0, %v1517
    %v1525 = vmul.f32 %v1524, %v1523
    %v1526 = vrot.slane %v1407, 6
    %v1528 = vmul.f32 %v1517, %v1526
    %v1529 = vadd.f32 %v1525, %v1528
    %v1531 = vrot.slane %v1529, 4
    %v1532 = vsel %vm696, %v1531, 0
    %1534 = vmatpush.msra.mxu0 0.0
    %1535 = vmatpush.msra.mxu0 0.0
    %1536 = vmatpush.msra.mxu0 0.0
    %1537 = vmatpush.msra.mxu0 0.0
    %1538 = vmatpush.msra.mxu0 0.0
    %1539 = vmatpush.msra.mxu0 0.0
    %1540 = vmatpush.msra.mxu0 0.0
    %1541 = vmatpush.msra.mxu0 0.0
    %1542 = vmatpush.msra.mxu0 %v676
    %1543 = vmatpush.msra.mxu0 %v675
    %1544 = vmatpush.msra.mxu0 %v674
    %1545 = vmatpush.msra.mxu0 %v673
    %1546 = vmatpush.msra.mxu0 %v672
    %1547 = vmatpush.msra.mxu0 %v671
    %1548 = vmatpush.msra.mxu0 %v670
    %1549 = vmatpush.msra.mxu0 %v669
    %1550 = vmatmul.f32.gmra.mxu0 %v1532
    %v1551 = vpop.f32.mrf.mxu0
    %v1552 = vadd.f32 0.0, %v1551
    %1553 = vdwg.mxu0
    %1554 = vmatpush.msra.mxu0 0.0
    %1555 = vmatpush.msra.mxu0 0.0
    %1556 = vmatpush.msra.mxu0 0.0
    %1557 = vmatpush.msra.mxu0 0.0
    %1558 = vmatpush.msra.mxu0 0.0
    %1559 = vmatpush.msra.mxu0 0.0
    %1560 = vmatpush.msra.mxu0 0.0
    %1561 = vmatpush.msra.mxu0 0.0
    %1562 = vmatpush.msra.mxu0 %v685
    %1563 = vmatpush.msra.mxu0 %v684
    %1564 = vmatpush.msra.mxu0 %v683
    %1565 = vmatpush.msra.mxu0 %v682
    %1566 = vmatpush.msra.mxu0 %v681
    %1567 = vmatpush.msra.mxu0 %v680
    %1568 = vmatpush.msra.mxu0 %v679
    %1569 = vmatpush.msra.mxu0 %v678
    %1570 = vmatmul.f32.gmra.mxu0 %v1532
    %v1571 = vpop.f32.mrf.mxu0
    %v1572 = vadd.f32 0.0, %v1571
    %1573 = vdwg.mxu0
    %1574 = vmatpush.msra.mxu0 0.0
    %1575 = vmatpush.msra.mxu0 0.0
    %1576 = vmatpush.msra.mxu0 0.0
    %1577 = vmatpush.msra.mxu0 0.0
    %1578 = vmatpush.msra.mxu0 0.0
    %1579 = vmatpush.msra.mxu0 0.0
    %1580 = vmatpush.msra.mxu0 0.0
    %1581 = vmatpush.msra.mxu0 0.0
    %1582 = vmatpush.msra.mxu0 %v694
    %1583 = vmatpush.msra.mxu0 %v693
    %1584 = vmatpush.msra.mxu0 %v692
    %1585 = vmatpush.msra.mxu0 %v691
    %1586 = vmatpush.msra.mxu0 %v690
    %1587 = vmatpush.msra.mxu0 %v689
    %1588 = vmatpush.msra.mxu0 %v688
    %1589 = vmatpush.msra.mxu0 %v687
    %1590 = vmatmul.f32.gmra.mxu0 %v1532
    %v1591 = vpop.f32.mrf.mxu0
    %v1592 = vadd.f32 %v741, %v1591
    %1593 = vdwg.mxu0
    %v1595 = vrot.slane %v1552, 2
    %v1597 = vadd.f32 %v531, %v1595
    %v1598 = vxor.u32 %v1597, 2147483648
    %v1599 = vmul.f32 %v1598, 1.442695
    %v1600 = vpow.pop %v1599
    %v1601 = vadd.f32 %v1600, 1.0
    %v1602 = vrcp.pop %v1601
    %v1603 = vmul.f32 %v1601, %v1602
    %v1604 = vsub.f32 1.0, %v1603
    %v1605 = vmul.f32 %v1602, %v1604
    %v1606 = vadd.f32 %v1602, %v1605
    %vm1607 = vweird.f32 %v1601
    %vm1608 = vweird.f32 %v1602
    %vm1609 = vmor %vm1607, %vm1608
    %v1610 = vsel %vm1609, %v1602, %v1606
    %v1611 = vand.u32 2147483647, %v1601
    %vm1612 = vcmp.eq.f32.partialorder %v1611, 8.507059e+37
    %v1613 = vand.u32 %v1601, 2147483648
    %v1614 = vor.u32 1.1754944e-38, %v1613
    %v1615 = vsel %vm1612, %v1614, %v1610
    %v1616 = vmul.f32 1.0, %v1615
    %v1618 = vrot.slane %v1572, 2
    %v1620 = vadd.f32 %v599, %v1618
    %v1621 = vxor.u32 %v1620, 2147483648
    %v1622 = vmul.f32 %v1621, 1.442695
    %v1623 = vpow.pop %v1622
    %v1624 = vadd.f32 %v1623, 1.0
    %v1625 = vrcp.pop %v1624
    %v1626 = vmul.f32 %v1624, %v1625
    %v1627 = vsub.f32 1.0, %v1626
    %v1628 = vmul.f32 %v1625, %v1627
    %v1629 = vadd.f32 %v1625, %v1628
    %vm1630 = vweird.f32 %v1624
    %vm1631 = vweird.f32 %v1625
    %vm1632 = vmor %vm1630, %vm1631
    %v1633 = vsel %vm1632, %v1625, %v1629
    %v1634 = vand.u32 2147483647, %v1624
    %vm1635 = vcmp.eq.f32.partialorder %v1634, 8.507059e+37
    %v1636 = vand.u32 %v1624, 2147483648
    %v1637 = vor.u32 1.1754944e-38, %v1636
    %v1638 = vsel %vm1635, %v1637, %v1633
    %v1639 = vmul.f32 1.0, %v1638
    %v1641 = vrot.slane %v1592, 2
    %v1643 = vmul.f32 %v1616, %v1641
    %v1644 = vadd.f32 %v667, %v1643
    %v1645 = vtanh.pop %v1644
    %v1646 = vsub.f32 1.0, %v1639
    %v1647 = vmul.f32 %v1646, %v1645
    %v1648 = vrot.slane %v1529, 6
    %v1650 = vmul.f32 %v1639, %v1648
    %v1651 = vadd.f32 %v1647, %v1650
    %v1653 = vrot.slane %v1651, 6
    %v1654 = vsel %vm696, %v1653, 0
    %1656 = vmatpush.msra.mxu0 0.0
    %1657 = vmatpush.msra.mxu0 0.0
    %1658 = vmatpush.msra.mxu0 0.0
    %1659 = vmatpush.msra.mxu0 0.0
    %1660 = vmatpush.msra.mxu0 0.0
    %1661 = vmatpush.msra.mxu0 0.0
    %1662 = vmatpush.msra.mxu0 0.0
    %1663 = vmatpush.msra.mxu0 0.0
    %1664 = vmatpush.msra.mxu0 %v676
    %1665 = vmatpush.msra.mxu0 %v675
    %1666 = vmatpush.msra.mxu0 %v674
    %1667 = vmatpush.msra.mxu0 %v673
    %1668 = vmatpush.msra.mxu0 %v672
    %1669 = vmatpush.msra.mxu0 %v671
    %1670 = vmatpush.msra.mxu0 %v670
    %1671 = vmatpush.msra.mxu0 %v669
    %1672 = vmatmul.f32.gmra.mxu0 %v1654
    %v1673 = vpop.f32.mrf.mxu0
    %v1674 = vadd.f32 0.0, %v1673
    %1675 = vdwg.mxu0
    %1676 = vmatpush.msra.mxu0 0.0
    %1677 = vmatpush.msra.mxu0 0.0
    %1678 = vmatpush.msra.mxu0 0.0
    %1679 = vmatpush.msra.mxu0 0.0
    %1680 = vmatpush.msra.mxu0 0.0
    %1681 = vmatpush.msra.mxu0 0.0
    %1682 = vmatpush.msra.mxu0 0.0
    %1683 = vmatpush.msra.mxu0 0.0
    %1684 = vmatpush.msra.mxu0 %v685
    %1685 = vmatpush.msra.mxu0 %v684
    %1686 = vmatpush.msra.mxu0 %v683
    %1687 = vmatpush.msra.mxu0 %v682
    %1688 = vmatpush.msra.mxu0 %v681
    %1689 = vmatpush.msra.mxu0 %v680
    %1690 = vmatpush.msra.mxu0 %v679
    %1691 = vmatpush.msra.mxu0 %v678
    %1692 = vmatmul.f32.gmra.mxu0 %v1654
    %v1693 = vpop.f32.mrf.mxu0
    %v1694 = vadd.f32 0.0, %v1693
    %1695 = vdwg.mxu0
    %1696 = vmatpush.msra.mxu0 0.0
    %1697 = vmatpush.msra.mxu0 0.0
    %1698 = vmatpush.msra.mxu0 0.0
    %1699 = vmatpush.msra.mxu0 0.0
    %1700 = vmatpush.msra.mxu0 0.0
    %1701 = vmatpush.msra.mxu0 0.0
    %1702 = vmatpush.msra.mxu0 0.0
    %1703 = vmatpush.msra.mxu0 0.0
    %1704 = vmatpush.msra.mxu0 %v694
    %1705 = vmatpush.msra.mxu0 %v693
    %1706 = vmatpush.msra.mxu0 %v692
    %1707 = vmatpush.msra.mxu0 %v691
    %1708 = vmatpush.msra.mxu0 %v690
    %1709 = vmatpush.msra.mxu0 %v689
    %1710 = vmatpush.msra.mxu0 %v688
    %1711 = vmatpush.msra.mxu0 %v687
    %1712 = vmatmul.f32.gmra.mxu0 %v1654
    %v1713 = vpop.f32.mrf.mxu0
    %v1714 = vadd.f32 %v741, %v1713
    %1715 = vdwg.mxu0
    %v1716 = vadd.f32 %v532, %v1674
    %v1717 = vxor.u32 %v1716, 2147483648
    %v1718 = vmul.f32 %v1717, 1.442695
    %v1719 = vpow.pop %v1718
    %v1720 = vadd.f32 %v1719, 1.0
    %v1721 = vrcp.pop %v1720
    %v1722 = vmul.f32 %v1720, %v1721
    %v1723 = vsub.f32 1.0, %v1722
    %v1724 = vmul.f32 %v1721, %v1723
    %v1725 = vadd.f32 %v1721, %v1724
    %vm1726 = vweird.f32 %v1720
    %vm1727 = vweird.f32 %v1721
    %vm1728 = vmor %vm1726, %vm1727
    %v1729 = vsel %vm1728, %v1721, %v1725
    %v1730 = vand.u32 2147483647, %v1720
    %vm1731 = vcmp.eq.f32.partialorder %v1730, 8.507059e+37
    %v1732 = vand.u32 %v1720, 2147483648
    %v1733 = vor.u32 1.1754944e-38, %v1732
    %v1734 = vsel %vm1731, %v1733, %v1729
    %v1735 = vmul.f32 1.0, %v1734
    %v1736 = vadd.f32 %v600, %v1694
    %v1737 = vxor.u32 %v1736, 2147483648
    %v1738 = vmul.f32 %v1737, 1.442695
    %v1739 = vpow.pop %v1738
    %v1740 = vadd.f32 %v1739, 1.0
    %v1741 = vrcp.pop %v1740
    %v1742 = vmul.f32 %v1740, %v1741
    %v1743 = vsub.f32 1.0, %v1742
    %v1744 = vmul.f32 %v1741, %v1743
    %v1745 = vadd.f32 %v1741, %v1744
    %vm1746 = vweird.f32 %v1740
    %vm1747 = vweird.f32 %v1741
    %vm1748 = vmor %vm1746, %vm1747
    %v1749 = vsel %vm1748, %v1741, %v1745
    %v1750 = vand.u32 2147483647, %v1740
    %vm1751 = vcmp.eq.f32.partialorder %v1750, 8.507059e+37
    %v1752 = vand.u32 %v1740, 2147483648
    %v1753 = vor.u32 1.1754944e-38, %v1752
    %v1754 = vsel %vm1751, %v1753, %v1749
    %v1755 = vmul.f32 1.0, %v1754
    %v1756 = vmul.f32 %v1735, %v1714
    %v1757 = vadd.f32 %v668, %v1756
    %v1758 = vtanh.pop %v1757
    %v1759 = vsub.f32 1.0, %v1755
    %v1760 = vmul.f32 %v1759, %v1758
    %v1762 = vmul.f32 %v1755, %v1653
    %v1763 = vadd.f32 %v1760, %v1762
    %v1765 = vsel %vm696, %v1763, 0
    %1767 = vmatpush.msra.mxu0 0.0
    %1768 = vmatpush.msra.mxu0 0.0
    %1769 = vmatpush.msra.mxu0 0.0
    %1770 = vmatpush.msra.mxu0 0.0
    %1771 = vmatpush.msra.mxu0 0.0
    %1772 = vmatpush.msra.mxu0 0.0
    %1773 = vmatpush.msra.mxu0 0.0
    %1774 = vmatpush.msra.mxu0 0.0
    %1775 = vmatpush.msra.mxu0 %v676
    %1776 = vmatpush.msra.mxu0 %v675
    %1777 = vmatpush.msra.mxu0 %v674
    %1778 = vmatpush.msra.mxu0 %v673
    %1779 = vmatpush.msra.mxu0 %v672
    %1780 = vmatpush.msra.mxu0 %v671
    %1781 = vmatpush.msra.mxu0 %v670
    %1782 = vmatpush.msra.mxu0 %v669
    %1783 = vmatmul.f32.gmra.mxu0 %v1765
    %v1784 = vpop.f32.mrf.mxu0
    %v1785 = vadd.f32 0.0, %v1784
    %1786 = vdwg.mxu0
    %1787 = vmatpush.msra.mxu0 0.0
    %1788 = vmatpush.msra.mxu0 0.0
    %1789 = vmatpush.msra.mxu0 0.0
    %1790 = vmatpush.msra.mxu0 0.0
    %1791 = vmatpush.msra.mxu0 0.0
    %1792 = vmatpush.msra.mxu0 0.0
    %1793 = vmatpush.msra.mxu0 0.0
    %1794 = vmatpush.msra.mxu0 0.0
    %1795 = vmatpush.msra.mxu0 %v685
    %1796 = vmatpush.msra.mxu0 %v684
    %1797 = vmatpush.msra.mxu0 %v683
    %1798 = vmatpush.msra.mxu0 %v682
    %1799 = vmatpush.msra.mxu0 %v681
    %1800 = vmatpush.msra.mxu0 %v680
    %1801 = vmatpush.msra.mxu0 %v679
    %1802 = vmatpush.msra.mxu0 %v678
    %1803 = vmatmul.f32.gmra.mxu0 %v1765
    %v1804 = vpop.f32.mrf.mxu0
    %v1805 = vadd.f32 0.0, %v1804
    %1806 = vdwg.mxu0
    %1807 = vmatpush.msra.mxu0 0.0
    %1808 = vmatpush.msra.mxu0 0.0
    %1809 = vmatpush.msra.mxu0 0.0
    %1810 = vmatpush.msra.mxu0 0.0
    %1811 = vmatpush.msra.mxu0 0.0
    %1812 = vmatpush.msra.mxu0 0.0
    %1813 = vmatpush.msra.mxu0 0.0
    %1814 = vmatpush.msra.mxu0 0.0
    %1815 = vmatpush.msra.mxu0 %v694
    %1816 = vmatpush.msra.mxu0 %v693
    %1817 = vmatpush.msra.mxu0 %v692
    %1818 = vmatpush.msra.mxu0 %v691
    %1819 = vmatpush.msra.mxu0 %v690
    %1820 = vmatpush.msra.mxu0 %v689
    %1821 = vmatpush.msra.mxu0 %v688
    %1822 = vmatpush.msra.mxu0 %v687
    %1823 = vmatmul.f32.gmra.mxu0 %v1765
    %v1824 = vpop.f32.mrf.mxu0
    %v1825 = vadd.f32 %v741, %v1824
    %1826 = vdwg.mxu0
    %v1828 = vrot.slane %v1785, 6
    %v1830 = vadd.f32 %v532, %v1828
    %v1831 = vxor.u32 %v1830, 2147483648
    %v1832 = vmul.f32 %v1831, 1.442695
    %v1833 = vpow.pop %v1832
    %v1834 = vadd.f32 %v1833, 1.0
    %v1835 = vrcp.pop %v1834
    %v1836 = vmul.f32 %v1834, %v1835
    %v1837 = vsub.f32 1.0, %v1836
    %v1838 = vmul.f32 %v1835, %v1837
    %v1839 = vadd.f32 %v1835, %v1838
    %vm1840 = vweird.f32 %v1834
    %vm1841 = vweird.f32 %v1835
    %vm1842 = vmor %vm1840, %vm1841
    %v1843 = vsel %vm1842, %v1835, %v1839
    %v1844 = vand.u32 2147483647, %v1834
    %vm1845 = vcmp.eq.f32.partialorder %v1844, 8.507059e+37
    %v1846 = vand.u32 %v1834, 2147483648
    %v1847 = vor.u32 1.1754944e-38, %v1846
    %v1848 = vsel %vm1845, %v1847, %v1843
    %v1849 = vmul.f32 1.0, %v1848
    %v1851 = vrot.slane %v1805, 6
    %v1853 = vadd.f32 %v600, %v1851
    %v1854 = vxor.u32 %v1853, 2147483648
    %v1855 = vmul.f32 %v1854, 1.442695
    %v1856 = vpow.pop %v1855
    %v1857 = vadd.f32 %v1856, 1.0
    %v1858 = vrcp.pop %v1857
    %v1859 = vmul.f32 %v1857, %v1858
    %v1860 = vsub.f32 1.0, %v1859
    %v1861 = vmul.f32 %v1858, %v1860
    %v1862 = vadd.f32 %v1858, %v1861
    %vm1863 = vweird.f32 %v1857
    %vm1864 = vweird.f32 %v1858
    %vm1865 = vmor %vm1863, %vm1864
    %v1866 = vsel %vm1865, %v1858, %v1862
    %v1867 = vand.u32 2147483647, %v1857
    %vm1868 = vcmp.eq.f32.partialorder %v1867, 8.507059e+37
    %v1869 = vand.u32 %v1857, 2147483648
    %v1870 = vor.u32 1.1754944e-38, %v1869
    %v1871 = vsel %vm1868, %v1870, %v1866
    %v1872 = vmul.f32 1.0, %v1871
    %v1874 = vrot.slane %v1825, 6
    %v1876 = vmul.f32 %v1849, %v1874
    %v1877 = vadd.f32 %v668, %v1876
    %v1878 = vtanh.pop %v1877
    %v1879 = vsub.f32 1.0, %v1872
    %v1880 = vmul.f32 %v1879, %v1878
    %v1881 = vrot.slane %v1763, 6
    %v1883 = vmul.f32 %v1872, %v1881
    %v1884 = vadd.f32 %v1880, %v1883
    %v1885 = vld [vmem:[%s7] sm:$0xff]
    %v1886 = vld [vmem:[%s7 + $0x8] sm:$0xff]
    %v1887 = vld [vmem:[%s7 + $0x10] sm:$0xff]
    %v1888 = vld [vmem:[%s7 + $0x18] sm:$0xff]
    %v1889 = vld [vmem:[%s7 + $0x20] sm:$0xff]
    %v1890 = vld [vmem:[%s7 + $0x28] sm:$0xff]
    %v1891 = vld [vmem:[%s7 + $0x30] sm:$0xff]
    %v1892 = vld [vmem:[%s7 + $0x38] sm:$0xff]
    %v1893 = vld [vmem:[%s8] sm:$0xff]
    %v1894 = vld [vmem:[%s8 + $0x8] sm:$0xff]
    %v1895 = vld [vmem:[%s8 + $0x10] sm:$0xff]
    %v1896 = vld [vmem:[%s8 + $0x18] sm:$0xff]
    %v1897 = vld [vmem:[%s8 + $0x20] sm:$0xff]
    %v1898 = vld [vmem:[%s8 + $0x28] sm:$0xff]
    %v1899 = vld [vmem:[%s8 + $0x30] sm:$0xff]
    %v1900 = vld [vmem:[%s8 + $0x38] sm:$0xff]
    %1901 = vmatpush.msra.mxu0 0.0
    %1902 = vmatpush.msra.mxu0 0.0
    %1903 = vmatpush.msra.mxu0 0.0
    %1904 = vmatpush.msra.mxu0 0.0
    %1905 = vmatpush.msra.mxu0 0.0
    %1906 = vmatpush.msra.mxu0 0.0
    %1907 = vmatpush.msra.mxu0 0.0
    %1908 = vmatpush.msra.mxu0 0.0
    %1909 = vmatpush.msra.mxu0 %v1900
    %1910 = vmatpush.msra.mxu0 %v1899
    %1911 = vmatpush.msra.mxu0 %v1898
    %1912 = vmatpush.msra.mxu0 %v1897
    %1913 = vmatpush.msra.mxu0 %v1896
    %1914 = vmatpush.msra.mxu0 %v1895
    %1915 = vmatpush.msra.mxu0 %v1894
    %1916 = vmatpush.msra.mxu0 %v1893
    %1917 = vmatmul.f32.gmra.mxu0 %v811
    %v1918 = vpop.f32.mrf.mxu0
    %v1919 = vadd.f32 0.0, %v1918
    %1920 = vdwg.mxu0
    %v1922 = vrot.slane %v1884, 2
    %v1923 = vsel %vm696, %v1922, 0
    %1925 = vmatpush.msra.mxu0 0.0
    %1926 = vmatpush.msra.mxu0 0.0
    %1927 = vmatpush.msra.mxu0 0.0
    %1928 = vmatpush.msra.mxu0 0.0
    %1929 = vmatpush.msra.mxu0 0.0
    %1930 = vmatpush.msra.mxu0 0.0
    %1931 = vmatpush.msra.mxu0 0.0
    %1932 = vmatpush.msra.mxu0 0.0
    %1933 = vmatpush.msra.mxu0 %v1892
    %1934 = vmatpush.msra.mxu0 %v1891
    %1935 = vmatpush.msra.mxu0 %v1890
    %1936 = vmatpush.msra.mxu0 %v1889
    %1937 = vmatpush.msra.mxu0 %v1888
    %1938 = vmatpush.msra.mxu0 %v1887
    %1939 = vmatpush.msra.mxu0 %v1886
    %1940 = vmatpush.msra.mxu0 %v1885
    %1941 = vmatmul.f32.gmra.mxu0 %v1923
    %v1942 = vpop.f32.mrf.mxu0
    %v1943 = vadd.f32 %v1919, %v1942
    %1944 = vdwg.mxu0
    %v1945 = vld [vmem:[%s9] sm:$0x1]
    %v1947 = vperm.slane %v1945, 0
    %v1949 = vadd.f32 %v1943, %v1947
    %vm1950 = vcmask 74752
    %1951 = vst.msk [vmem:[#allocation2] sm:$0x3] %vm1950, %v1949
    // Predicated region
    $region42: #{a_call__.1} parent=1 // pred_check
      _
    $region43: #{a_call__.1} parent=1 // pred_check_branch
      %1953 = sbr.rel (0) target = $region45
    $region44: #{a_call__.1} parent=1 // pred_region
      %1955 = vsyncadd [#allocation3], 0
      %s1957 = sshll.u32 [#allocation2], 4
      %s1958 = int_to_ptr.vmem [resolvable:$true] %s1957
      %s1959 = sshll.u32 %s10, 4
      %s1960 = int_to_ptr.hbm [resolvable:$true] %s1959
      %1962 = dma.vmem_to_hbm [thread:$0]  %s1958, 32, %s1960, [#allocation3]
    $region45: #{a_call__.1} parent=1 // pred_fallthru
      _
    // Predicated region
    $region46: #{a_call__.1} parent=1 // pred_check
      _
    $region47: #{a_call__.1} parent=1 // pred_check_branch
      %1964 = sbr.rel (0) target = $region49
    $region48: #{a_call__.1} parent=1 // pred_region
      %1966 = dma.done [#allocation3], 32
    $region49: #{a_call__.1} parent=1 // pred_fallthru
      _
    %1967 = vsyncpa [#allocation3], 1

</llo_original>
